<compile_context>
chip_gen: v6e
topology: v6e:2x2x1
jax: 0.10.0
libtpu: 0.0.40
codegen_flags: <defaults>
</compile_context>

<pallas_src>
import functools

import jax
import jax.numpy as jnp
from jax import lax
from jax.experimental import pallas as pl
from jax.experimental.pallas import tpu as pltpu


_IN_C, _IN_H, _IN_W = 3, 28, 28          # Linear(128,...) after the two convs
_K = _IN_C * _IN_H * _IN_W               # 2352 flattened input features
_HID = 256                               # fc1 width
_TILE_B_MAX = 1024                       # batch-tile cap (M of the GEMMs)
_NEG = -1e30                             # bias for padded logit lanes


# ------------------------------ fused kernel --------------------------------

def _fused_forward_kernel(x_ref, wc_ref, bc_ref, w2_ref, b2_ref, o_ref):
    """Whole ConvNet forward for one batch tile; everything stays in VMEM.

    x_ref : [TB, 2352] bf16   flattened image
    wc_ref: [2352, 256] bf16  composed conv1*conv2*flatten*fc1 weight
    bc_ref: [1, 256]    f32   composed bias
    w2_ref: [256, Cp]   bf16  fc2 weight, zero-padded to lane-dense Cp
    b2_ref: [1, Cp]     f32   fc2 bias, padded lanes = -1e30
    o_ref : [TB, Cp]    f32   softmax probabilities (padded lanes ~ 0)
    """
    h = jnp.dot(x_ref[...], wc_ref[...], preferred_element_type=jnp.float32)
    h = jnp.maximum(h + bc_ref[...], 0.0)                       # fc1 + ReLU
    logits = jnp.dot(h.astype(jnp.bfloat16), w2_ref[...],
                     preferred_element_type=jnp.float32) + b2_ref[...]
    m = jnp.max(logits, axis=-1, keepdims=True)
    e = jnp.exp(logits - m)
    denom = jnp.sum(e, axis=-1, keepdims=True)
    o_ref[...] = (e * pl.reciprocal(denom, approx=True)).astype(o_ref.dtype)


# ------------------------------- glue (JAX) ---------------------------------

def _encoder_apply(x_nchw, params, *, with_bias):
    """PyTorch-semantics encoder + nn.Flatten ((C,H,W) order) in f32 JAX."""
    w1 = jnp.transpose(params["w_conv1"], (2, 3, 1, 0))           # HWIO
    w2 = jnp.transpose(params["w_conv2"], (2, 3, 1, 0))
    x = jnp.transpose(x_nchw, (0, 2, 3, 1))
    y = lax.conv_general_dilated(x, w1, (4, 4), "VALID",
                                 dimension_numbers=("NHWC", "HWIO", "NHWC"))
    if with_bias:
        y = y + params["b_conv1"]
    y = lax.conv_general_dilated(y, w2, (2, 2), "VALID",
                                 dimension_numbers=("NHWC", "HWIO", "NHWC"))
    if with_bias:
        y = y + params["b_conv2"]
    y = jnp.transpose(y, (0, 3, 1, 2))                            # back to NCHW
    return y.reshape(x_nchw.shape[0], -1)                         # [B, 128]


def prepare_params(params, num_classes):
    """One-time parameter prep (hoisted out of the per-step forward).

    conv1, conv2, flatten and fc1 are all linear with no activation in
    between, so they are composed into a single [2352, 256] matrix by pushing
    the 2352 basis images through the (bias-free) encoder.  fc2 is zero-padded
    to a multiple of 128 output lanes; padded lanes get a -1e30 bias so their
    softmax probability underflows to exactly 0.
    """
    basis = jnp.eye(_K, dtype=jnp.float32).reshape(_K, _IN_C, _IN_H, _IN_W)
    w_enc = _encoder_apply(basis, params, with_bias=False)        # [2352, 128]
    f_bias = _encoder_apply(jnp.zeros((1, _IN_C, _IN_H, _IN_W), jnp.float32),
                            params, with_bias=True)               # [1, 128]
    wc = w_enc @ params["w_fc1"]                                   # [2352, 256]
    bc = f_bias @ params["w_fc1"] + params["b_fc1"][None, :]       # [1, 256]

    cp = ((num_classes + 127) // 128) * 128
    w2p = jnp.zeros((_HID, cp), jnp.float32).at[:, :num_classes].set(
        params["w_fc2"])
    b2p = jnp.full((1, cp), _NEG, jnp.float32).at[0, :num_classes].set(
        params["b_fc2"])
    return {
        "wc": wc.astype(jnp.bfloat16),
        "bc": bc.astype(jnp.float32),
        "w2p": w2p.astype(jnp.bfloat16),
        "b2p": b2p.astype(jnp.float32),
    }


@functools.partial(jax.jit, static_argnames=("num_classes",))
def convnet_forward(image_nchw, prep, *, num_classes):
    """image_nchw: [B, 3, 28, 28] float -> [B, num_classes] softmax probs."""
    B = image_nchw.shape[0]
    cp = prep["w2p"].shape[1]

    # (C,H,W) flatten is a free contiguous reshape; bf16 halves kernel DMA.
    x = image_nchw.astype(jnp.bfloat16).reshape(B, _K)

    # Batch tile: sublane-aligned, capped, and >=2 grid steps when the batch
    # allows so the "parallel" axis shards across v7x's 2 TensorCores.
    tb = min(_TILE_B_MAX, ((-(-B // 2) + 7) // 8) * 8)
    bp = -(-B // tb) * tb
    if bp != B:
        x = jnp.pad(x, ((0, bp - B), (0, 0)))

    const = lambda i: (0, 0)
    out = pl.pallas_call(
        _fused_forward_kernel,
        out_shape=jax.ShapeDtypeStruct((bp, cp), jnp.float32),
        grid=(bp // tb,),
        in_specs=[
            pl.BlockSpec((tb, _K), lambda i: (i, 0)),      # flattened images
            pl.BlockSpec((_K, _HID), const),               # composed Wc
            pl.BlockSpec((1, _HID), const),                # composed bias
            pl.BlockSpec((_HID, cp), const),               # fc2 (padded)
            pl.BlockSpec((1, cp), const),                  # fc2 bias (padded)
        ],
        out_specs=pl.BlockSpec((tb, cp), lambda i: (i, 0)),
        compiler_params=pltpu.CompilerParams(
            dimension_semantics=("parallel",),
            vmem_limit_bytes=32 * 1024 * 1024),
    )(x, prep["wc"], prep["bc"], prep["w2p"], prep["b2p"])
    return out[:B, :num_classes]


# ------------------------------- parameters ---------------------------------

def init_params(key, num_classes):
    ks = jax.random.split(key, 8)
    scale = 0.05
    # conv weights in PyTorch OIHW layout; fc weights stored as [in, out]
    # (transpose of PyTorch's [out, in]) with fc1 rows in (C,H,W) flatten order.
    return {
        "w_conv1": scale * jax.random.normal(ks[0], (16, 3, 8, 8), jnp.float32),
        "b_conv1": scale * jax.random.normal(ks[1], (16,), jnp.float32),
        "w_conv2": scale * jax.random.normal(ks[2], (32, 16, 4, 4), jnp.float32),
        "b_conv2": scale * jax.random.normal(ks[3], (32,), jnp.float32),
        "w_fc1": scale * jax.random.normal(ks[4], (128, 256), jnp.float32),
        "b_fc1": scale * jax.random.normal(ks[5], (256,), jnp.float32),
        "w_fc2": scale * jax.random.normal(ks[6], (256, num_classes), jnp.float32),
        "b_fc2": scale * jax.random.normal(ks[7], (num_classes,), jnp.float32),
    }


def _reference_forward(image, params):
    """Pure-JAX f32 reference (matches the PyTorch module semantics).

    Note: the PyTorch ConvNet has NO activation between/after the convs."""
    feats = _encoder_apply(image, params, with_bias=True)          # [B, 128]
    h = jnp.maximum(feats @ params["w_fc1"] + params["b_fc1"], 0.0)
    logits = h @ params["w_fc2"] + params["b_fc2"]
    return jax.nn.softmax(logits, axis=-1)


if __name__ == "__main__":
    num_classes = 10
    key = jax.random.PRNGKey(0)
    k_img, k_par = jax.random.split(key)

    # Linear(128, ...) after Conv(8/4) + Conv(4/2) implies 28x28 input (32*2*2).
    image = jax.random.normal(k_img, (2, 3, 28, 28), jnp.float32)
    params = init_params(k_par, num_classes)
    prep = prepare_params(params, num_classes)

    probs = jax.block_until_ready(
        convnet_forward(image, prep, num_classes=num_classes))
    ref = jax.block_until_ready(_reference_forward(image, params))

    assert probs.shape == (2, num_classes)
    assert bool(jnp.all(jnp.isfinite(probs)))
    # rows sum to 1 (approx reciprocal -> allow a little slack)
    assert bool(jnp.allclose(jnp.sum(probs, axis=-1), 1.0, atol=5e-3))
    # matches the f32 reference despite bf16 GEMM operands
    assert float(jnp.max(jnp.abs(probs - ref))) < 2e-2
    print("KERNEL_OK")
</pallas_src>

<mosaic_0001>
module attributes {stable_mosaic.version = 11 : i64} {
  func.func @_fused_forward_kernel(%arg0: i32, %arg1: memref<8x2352xbf16, #tpu.memory_space<vmem>>, %arg2: memref<2352x256xbf16, #tpu.memory_space<vmem>>, %arg3: memref<1x256xf32, #tpu.memory_space<vmem>>, %arg4: memref<256x128xbf16, #tpu.memory_space<vmem>>, %arg5: memref<1x128xf32, #tpu.memory_space<vmem>>, %arg6: memref<8x128xf32, #tpu.memory_space<vmem>>) attributes {dimension_semantics = [#tpu.dimension_semantics<parallel>], iteration_bounds = array<i64: 1>, scalar_prefetch = 0 : i64, scratch_operands = 0 : i64, tpu.core_type = #tpu.core_type<tc>, window_params = [{transform_indices = @transform_0, window_bounds = array<i64: 8, 2352>}, {pipeline_mode = #tpu.pipeline_mode<synchronous>, transform_indices = @transform_1, window_bounds = array<i64: 2352, 256>}, {pipeline_mode = #tpu.pipeline_mode<synchronous>, transform_indices = @transform_2, window_bounds = array<i64: 1, 256>}, {pipeline_mode = #tpu.pipeline_mode<synchronous>, transform_indices = @transform_3, window_bounds = array<i64: 256, 128>}, {pipeline_mode = #tpu.pipeline_mode<synchronous>, transform_indices = @transform_4, window_bounds = array<i64: 1, 128>}, {transform_indices = @transform_5, window_bounds = array<i64: 8, 128>}]} {
    %c0 = arith.constant 0 : index
    %c0_0 = arith.constant 0 : index
    %0 = vector.load %arg1[%c0, %c0_0] : memref<8x2352xbf16, #tpu.memory_space<vmem>>, vector<8x2352xbf16>
    %c0_1 = arith.constant 0 : index
    %c0_2 = arith.constant 0 : index
    %1 = vector.load %arg2[%c0_1, %c0_2] : memref<2352x256xbf16, #tpu.memory_space<vmem>>, vector<2352x256xbf16>
    %cst = arith.constant dense<0.000000e+00> : vector<8x256xf32>
    %2 = tpu.matmul %0, %1, %cst {dimension_numbers = #tpu.dot_dimension_numbers<[1], [0], [0], [1], [0, 0, 1, 1], [], []>} : vector<8x2352xbf16>, vector<2352x256xbf16>, vector<8x256xf32> -> vector<8x256xf32>
    %c0_3 = arith.constant 0 : index
    %c0_4 = arith.constant 0 : index
    %3 = vector.load %arg3[%c0_3, %c0_4] : memref<1x256xf32, #tpu.memory_space<vmem>>, vector<1x256xf32>
    %4 = vector.broadcast %3 : vector<1x256xf32> to vector<8x256xf32>
    %5 = arith.addf %2, %4 : vector<8x256xf32>
    %cst_5 = arith.constant 0.000000e+00 : f32
    %6 = vector.broadcast %cst_5 : f32 to vector<8x256xf32>
    %7 = arith.maximumf %5, %6 : vector<8x256xf32>
    %8 = arith.truncf %7 : vector<8x256xf32> to vector<8x256xbf16>
    %c0_6 = arith.constant 0 : index
    %c0_7 = arith.constant 0 : index
    %9 = vector.load %arg4[%c0_6, %c0_7] : memref<256x128xbf16, #tpu.memory_space<vmem>>, vector<256x128xbf16>
    %cst_8 = arith.constant dense<0.000000e+00> : vector<8x128xf32>
    %10 = tpu.matmul %8, %9, %cst_8 {dimension_numbers = #tpu.dot_dimension_numbers<[1], [0], [0], [1], [0, 0, 1, 1], [], []>} : vector<8x256xbf16>, vector<256x128xbf16>, vector<8x128xf32> -> vector<8x128xf32>
    %c0_9 = arith.constant 0 : index
    %c0_10 = arith.constant 0 : index
    %11 = vector.load %arg5[%c0_9, %c0_10] : memref<1x128xf32, #tpu.memory_space<vmem>>, vector<1x128xf32>
    %12 = vector.broadcast %11 : vector<1x128xf32> to vector<8x128xf32>
    %13 = arith.addf %10, %12 : vector<8x128xf32>
    %cst_11 = arith.constant dense<0xFF800000> : vector<8xf32>
    %14 = vector.multi_reduction <maximumf>, %13, %cst_11 [1] : vector<8x128xf32> to vector<8xf32>
    %15 = vector.shape_cast %14 : vector<8xf32> to vector<8x1xf32>
    %16 = vector.broadcast %15 : vector<8x1xf32> to vector<8x128xf32>
    %17 = arith.subf %13, %16 : vector<8x128xf32>
    %18 = math.exp %17 : vector<8x128xf32>
    %cst_12 = arith.constant dense<0.000000e+00> : vector<8xf32>
    %19 = vector.multi_reduction <add>, %18, %cst_12 [1] : vector<8x128xf32> to vector<8xf32>
    %20 = vector.shape_cast %19 : vector<8xf32> to vector<8x1xf32>
    %21 = tpu.reciprocal %20 {approx = true} : vector<8x1xf32> -> vector<8x1xf32>
    %22 = vector.broadcast %21 : vector<8x1xf32> to vector<8x128xf32>
    %23 = arith.mulf %18, %22 : vector<8x128xf32>
    %c0_13 = arith.constant 0 : index
    %c0_14 = arith.constant 0 : index
    %24 = vector.load %arg6[%c0_13, %c0_14] : memref<8x128xf32, #tpu.memory_space<vmem>>, vector<8x128xf32>
    tpu.vector_store %arg6[%c0_13, %c0_14], %23 {strides = array<i32>} : memref<8x128xf32, #tpu.memory_space<vmem>>, vector<8x128xf32>,
    return
  }
  func.func @transform_0(%arg0: i32) -> (i32, i32) {
    %c0_i32 = arith.constant 0 : i32
    %c0_i32_0 = arith.constant 0 : i32
    return %arg0, %c0_i32 : i32, i32
  }
  func.func @transform_1(%arg0: i32) -> (i32, i32) {
    %c0_i32 = arith.constant 0 : i32
    %c0_i32_0 = arith.constant 0 : i32
    %c0_i32_1 = arith.constant 0 : i32
    return %c0_i32, %c0_i32_0 : i32, i32
  }
  func.func @transform_2(%arg0: i32) -> (i32, i32) {
    %c0_i32 = arith.constant 0 : i32
    %c0_i32_0 = arith.constant 0 : i32
    %c0_i32_1 = arith.constant 0 : i32
    return %c0_i32, %c0_i32_0 : i32, i32
  }
  func.func @transform_3(%arg0: i32) -> (i32, i32) {
    %c0_i32 = arith.constant 0 : i32
    %c0_i32_0 = arith.constant 0 : i32
    %c0_i32_1 = arith.constant 0 : i32
    return %c0_i32, %c0_i32_0 : i32, i32
  }
  func.func @transform_4(%arg0: i32) -> (i32, i32) {
    %c0_i32 = arith.constant 0 : i32
    %c0_i32_0 = arith.constant 0 : i32
    %c0_i32_1 = arith.constant 0 : i32
    return %c0_i32, %c0_i32_0 : i32, i32
  }
  func.func @transform_5(%arg0: i32) -> (i32, i32) {
    %c0_i32 = arith.constant 0 : i32
    %c0_i32_0 = arith.constant 0 : i32
    return %arg0, %c0_i32 : i32, i32
  }
}

</mosaic_0001>

<llo_original>
// kernel: convnet_forward.1
$region0: #{convnet_forward.1}
  #allocation0 [shape = 'u32[]', space=smem, size = 0x4, offset = 0x4, fixed_abs, tag = 'smem constant byte address 0x4 - core index']
  #allocation1 [shape = 'u32[144,128]{1,0:T(1,128)}', space=vmem, size = 0x12000, scoped, tag = 'internal scratch']
  %s0 = inlined_call_operand.vmem [shape: bf16[8,2352], index: 0, kind: input, shape index: {}]
  %s1 = inlined_call_operand.hbm [shape: bf16[2352,256], index: 1, kind: input, shape index: {}]
  %s2 = inlined_call_operand.hbm [shape: f32[1,256], index: 2, kind: input, shape index: {}]
  %s3 = inlined_call_operand.hbm [shape: bf16[256,128], index: 3, kind: input, shape index: {}]
  %s4 = inlined_call_operand.hbm [shape: f32[1,128], index: 4, kind: input, shape index: {}]
  %s5 = inlined_call_operand.vmem [shape: f32[8,128], index: 5, kind: output, shape index: {}]
  %s6 = sld [smem:[#allocation0]]
  $region46: #{convnet_forward.1} parent=0
    _
  %s8 = ssub.s32 1, %s6
  %s9 = scalar_select 0, %s8, %s6
  $region1: #{convnet_forward.1} parent=0
    #allocation2 [shape = 'u8[1204224]{0}', space=vmem, size = 0x126000, scoped, tag = 'input window, operand 1, single buffered']
    #allocation3 [shape = 's32[1]{0}', space=sflag, size = 0x4, scoped, tag = 'scoped memory for convnet_forward.1']
    #allocation4 [shape = 'u8[1024]{0}', space=vmem, size = 0x400, scoped, tag = 'input window, operand 2, single buffered']
    #allocation5 [shape = 's32[1]{0}', space=sflag, size = 0x4, scoped, tag = 'scoped memory for convnet_forward.1']
    #allocation6 [shape = 'u8[65536]{0}', space=vmem, size = 0x10000, scoped, tag = 'input window, operand 3, single buffered']
    #allocation7 [shape = 'u8[512]{0}', space=vmem, size = 0x400, scoped, tag = 'input window, operand 4, single buffered']
    #allocation8 [shape = 's32[1]{0}', space=sflag, size = 0x4, scoped, tag = 'scoped memory for convnet_forward.1']
    %10 = vsyncpa [#allocation3], 0
    %11 = vsyncpa [#allocation5], 0
    %12 = vsyncpa [#allocation8], 0
    // Predicated region
    $region2: #{convnet_forward.1} parent=1 // pred_check
      _
    $region3: #{convnet_forward.1} parent=1 // pred_check_branch
      %14 = sbr.rel (0) target = $region5
    $region4: #{convnet_forward.1} parent=1 // pred_region
      _
    $region5: #{convnet_forward.1} parent=1 // pred_fallthru
      _
    // Predicated region
    $region6: #{convnet_forward.1} parent=1 // pred_check
      _
    $region7: #{convnet_forward.1} parent=1 // pred_check_branch
      %16 = sbr.rel (0) target = $region9
    $region8: #{convnet_forward.1} parent=1 // pred_region
      %s18 = ssub.s32 37632, 37632
      %19 = vsyncadd [#allocation3], %s18
      %s20 = sshll.u32 [#allocation2], 4
      %s21 = int_to_ptr.vmem [resolvable:$true] %s20
      %26 = dma.hbm_to_vmem [thread:$0]  %s1, 37632, %s21, [#allocation3], 128, 128, 8
    $region9: #{convnet_forward.1} parent=1 // pred_fallthru
      _
    // Predicated region
    $region10: #{convnet_forward.1} parent=1 // pred_check
      _
    $region11: #{convnet_forward.1} parent=1 // pred_check_branch
      %28 = sbr.rel (0) target = $region13
    $region12: #{convnet_forward.1} parent=1 // pred_region
      %s30 = ssub.s32 32, 32
      %31 = vsyncadd [#allocation5], %s30
      %s33 = sshll.u32 [#allocation4], 4
      %s34 = int_to_ptr.vmem [resolvable:$true] %s33
      %36 = dma.hbm_to_vmem [thread:$0]  %s2, 32, %s34, [#allocation5]
    $region13: #{convnet_forward.1} parent=1 // pred_fallthru
      _
    // Predicated region
    $region14: #{convnet_forward.1} parent=1 // pred_check
      _
    $region15: #{convnet_forward.1} parent=1 // pred_check_branch
      %38 = sbr.rel (0) target = $region17
    $region16: #{convnet_forward.1} parent=1 // pred_region
      %s40 = ssub.s32 2048, 2048
      %41 = vsyncadd [#allocation5], %s40
      %s42 = sshll.u32 [#allocation6], 4
      %s43 = int_to_ptr.vmem [resolvable:$true] %s42
      %48 = dma.hbm_to_vmem [thread:$0]  %s3, 2048, %s43, [#allocation5], 64, 64, 4
    $region17: #{convnet_forward.1} parent=1 // pred_fallthru
      _
    // Predicated region
    $region18: #{convnet_forward.1} parent=1 // pred_check
      _
    $region19: #{convnet_forward.1} parent=1 // pred_check_branch
      %50 = sbr.rel (0) target = $region21
    $region20: #{convnet_forward.1} parent=1 // pred_region
      %s52 = ssub.s32 16, 16
      %53 = vsyncadd [#allocation8], %s52
      %s55 = sshll.u32 [#allocation7], 4
      %s56 = int_to_ptr.vmem [resolvable:$true] %s55
      %58 = dma.hbm_to_vmem [thread:$0]  %s4, 16, %s56, [#allocation8]
    $region21: #{convnet_forward.1} parent=1 // pred_fallthru
      _
    // Predicated region
    $region22: #{convnet_forward.1} parent=1 // pred_check
      _
    $region23: #{convnet_forward.1} parent=1 // pred_check_branch
      %60 = sbr.rel (0) target = $region25
    $region24: #{convnet_forward.1} parent=1 // pred_region
      %61 = dma.done [#allocation3], 37632
    $region25: #{convnet_forward.1} parent=1 // pred_fallthru
      _
    // Predicated region
    $region26: #{convnet_forward.1} parent=1 // pred_check
      _
    $region27: #{convnet_forward.1} parent=1 // pred_check_branch
      %63 = sbr.rel (0) target = $region29
    $region28: #{convnet_forward.1} parent=1 // pred_region
      %64 = dma.done [#allocation5], 32
    $region29: #{convnet_forward.1} parent=1 // pred_fallthru
      _
    // Predicated region
    $region30: #{convnet_forward.1} parent=1 // pred_check
      _
    $region31: #{convnet_forward.1} parent=1 // pred_check_branch
      %66 = sbr.rel (0) target = $region33
    $region32: #{convnet_forward.1} parent=1 // pred_region
      %67 = dma.done [#allocation5], 2048
    $region33: #{convnet_forward.1} parent=1 // pred_fallthru
      _
    // Predicated region
    $region34: #{convnet_forward.1} parent=1 // pred_check
      _
    $region35: #{convnet_forward.1} parent=1 // pred_check_branch
      %69 = sbr.rel (0) target = $region37
    $region36: #{convnet_forward.1} parent=1 // pred_region
      %70 = dma.done [#allocation8], 16
    $region37: #{convnet_forward.1} parent=1 // pred_fallthru
      _
    %v72 = vld [vmem:[%s0] sm:$0xff]
    %v73 = vld [vmem:[%s0 + $0x8] sm:$0xff]
    %v74 = vld [vmem:[%s0 + $0x10] sm:$0xff]
    %v75 = vld [vmem:[%s0 + $0x18] sm:$0xff]
    %v76 = vld [vmem:[%s0 + $0x20] sm:$0xff]
    %v77 = vld [vmem:[%s0 + $0x28] sm:$0xff]
    %v78 = vld [vmem:[%s0 + $0x30] sm:$0xff]
    %v79 = vld [vmem:[%s0 + $0x38] sm:$0xff]
    %v80 = vld [vmem:[%s0 + $0x40] sm:$0xff]
    %v81 = vld [vmem:[%s0 + $0x48] sm:$0xf]
    %v82 = vld [vmem:[#allocation2] sm:$0xff]
    %v83 = vld [vmem:[#allocation2 + $0x8] sm:$0xff]
    %v84 = vld [vmem:[#allocation2 + $0x10] sm:$0xff]
    %v85 = vld [vmem:[#allocation2 + $0x18] sm:$0xff]
    %v86 = vld [vmem:[#allocation2 + $0x20] sm:$0xff]
    %v87 = vld [vmem:[#allocation2 + $0x28] sm:$0xff]
    %v88 = vld [vmem:[#allocation2 + $0x30] sm:$0xff]
    %v89 = vld [vmem:[#allocation2 + $0x38] sm:$0xff]
    %v90 = vld [vmem:[#allocation2 + $0x40] sm:$0xff]
    %v91 = vld [vmem:[#allocation2 + $0x48] sm:$0xff]
    %v92 = vld [vmem:[#allocation2 + $0x50] sm:$0xff]
    %v93 = vld [vmem:[#allocation2 + $0x58] sm:$0xff]
    %v94 = vld [vmem:[#allocation2 + $0x60] sm:$0xff]
    %v95 = vld [vmem:[#allocation2 + $0x68] sm:$0xff]
    %v96 = vld [vmem:[#allocation2 + $0x70] sm:$0xff]
    %v97 = vld [vmem:[#allocation2 + $0x78] sm:$0xff]
    %v98 = vld [vmem:[#allocation2 + $0x80] sm:$0xff]
    %v99 = vld [vmem:[#allocation2 + $0x88] sm:$0xff]
    %v100 = vld [vmem:[#allocation2 + $0x90] sm:$0xff]
    %v101 = vld [vmem:[#allocation2 + $0x98] sm:$0xff]
    %v102 = vld [vmem:[#allocation2 + $0xa0] sm:$0xff]
    %v103 = vld [vmem:[#allocation2 + $0xa8] sm:$0xff]
    %v104 = vld [vmem:[#allocation2 + $0xb0] sm:$0xff]
    %v105 = vld [vmem:[#allocation2 + $0xb8] sm:$0xff]
    %v106 = vld [vmem:[#allocation2 + $0xc0] sm:$0xff]
    %v107 = vld [vmem:[#allocation2 + $0xc8] sm:$0xff]
    %v108 = vld [vmem:[#allocation2 + $0xd0] sm:$0xff]
    %v109 = vld [vmem:[#allocation2 + $0xd8] sm:$0xff]
    %v110 = vld [vmem:[#allocation2 + $0xe0] sm:$0xff]
    %v111 = vld [vmem:[#allocation2 + $0xe8] sm:$0xff]
    %v112 = vld [vmem:[#allocation2 + $0xf0] sm:$0xff]
    %v113 = vld [vmem:[#allocation2 + $0xf8] sm:$0xff]
    %v114 = vld [vmem:[#allocation2 + $0x100] sm:$0xff]
    %v115 = vld [vmem:[#allocation2 + $0x108] sm:$0xff]
    %v116 = vld [vmem:[#allocation2 + $0x110] sm:$0xff]
    %v117 = vld [vmem:[#allocation2 + $0x118] sm:$0xff]
    %v118 = vld [vmem:[#allocation2 + $0x120] sm:$0xff]
    %v119 = vld [vmem:[#allocation2 + $0x128] sm:$0xff]
    %v120 = vld [vmem:[#allocation2 + $0x130] sm:$0xff]
    %v121 = vld [vmem:[#allocation2 + $0x138] sm:$0xff]
    %v122 = vld [vmem:[#allocation2 + $0x140] sm:$0xff]
    %v123 = vld [vmem:[#allocation2 + $0x148] sm:$0xff]
    %v124 = vld [vmem:[#allocation2 + $0x150] sm:$0xff]
    %v125 = vld [vmem:[#allocation2 + $0x158] sm:$0xff]
    %v126 = vld [vmem:[#allocation2 + $0x160] sm:$0xff]
    %v127 = vld [vmem:[#allocation2 + $0x168] sm:$0xff]
    %v128 = vld [vmem:[#allocation2 + $0x170] sm:$0xff]
    %v129 = vld [vmem:[#allocation2 + $0x178] sm:$0xff]
    %v130 = vld [vmem:[#allocation2 + $0x180] sm:$0xff]
    %v131 = vld [vmem:[#allocation2 + $0x188] sm:$0xff]
    %v132 = vld [vmem:[#allocation2 + $0x190] sm:$0xff]
    %v133 = vld [vmem:[#allocation2 + $0x198] sm:$0xff]
    %v134 = vld [vmem:[#allocation2 + $0x1a0] sm:$0xff]
    %v135 = vld [vmem:[#allocation2 + $0x1a8] sm:$0xff]
    %v136 = vld [vmem:[#allocation2 + $0x1b0] sm:$0xff]
    %v137 = vld [vmem:[#allocation2 + $0x1b8] sm:$0xff]
    %v138 = vld [vmem:[#allocation2 + $0x1c0] sm:$0xff]
    %v139 = vld [vmem:[#allocation2 + $0x1c8] sm:$0xff]
    %v140 = vld [vmem:[#allocation2 + $0x1d0] sm:$0xff]
    %v141 = vld [vmem:[#allocation2 + $0x1d8] sm:$0xff]
    %v142 = vld [vmem:[#allocation2 + $0x1e0] sm:$0xff]
    %v143 = vld [vmem:[#allocation2 + $0x1e8] sm:$0xff]
    %v144 = vld [vmem:[#allocation2 + $0x1f0] sm:$0xff]
    %v145 = vld [vmem:[#allocation2 + $0x1f8] sm:$0xff]
    %v146 = vld [vmem:[#allocation2 + $0x200] sm:$0xff]
    %v147 = vld [vmem:[#allocation2 + $0x208] sm:$0xff]
    %v148 = vld [vmem:[#allocation2 + $0x210] sm:$0xff]
    %v149 = vld [vmem:[#allocation2 + $0x218] sm:$0xff]
    %v150 = vld [vmem:[#allocation2 + $0x220] sm:$0xff]
    %v151 = vld [vmem:[#allocation2 + $0x228] sm:$0xff]
    %v152 = vld [vmem:[#allocation2 + $0x230] sm:$0xff]
    %v153 = vld [vmem:[#allocation2 + $0x238] sm:$0xff]
    %v154 = vld [vmem:[#allocation2 + $0x240] sm:$0xff]
    %v155 = vld [vmem:[#allocation2 + $0x248] sm:$0xff]
    %v156 = vld [vmem:[#allocation2 + $0x250] sm:$0xff]
    %v157 = vld [vmem:[#allocation2 + $0x258] sm:$0xff]
    %v158 = vld [vmem:[#allocation2 + $0x260] sm:$0xff]
    %v159 = vld [vmem:[#allocation2 + $0x268] sm:$0xff]
    %v160 = vld [vmem:[#allocation2 + $0x270] sm:$0xff]
    %v161 = vld [vmem:[#allocation2 + $0x278] sm:$0xff]
    %v162 = vld [vmem:[#allocation2 + $0x280] sm:$0xff]
    %v163 = vld [vmem:[#allocation2 + $0x288] sm:$0xff]
    %v164 = vld [vmem:[#allocation2 + $0x290] sm:$0xff]
    %v165 = vld [vmem:[#allocation2 + $0x298] sm:$0xff]
    %v166 = vld [vmem:[#allocation2 + $0x2a0] sm:$0xff]
    %v167 = vld [vmem:[#allocation2 + $0x2a8] sm:$0xff]
    %v168 = vld [vmem:[#allocation2 + $0x2b0] sm:$0xff]
    %v169 = vld [vmem:[#allocation2 + $0x2b8] sm:$0xff]
    %v170 = vld [vmem:[#allocation2 + $0x2c0] sm:$0xff]
    %v171 = vld [vmem:[#allocation2 + $0x2c8] sm:$0xff]
    %v172 = vld [vmem:[#allocation2 + $0x2d0] sm:$0xff]
    %v173 = vld [vmem:[#allocation2 + $0x2d8] sm:$0xff]
    %v174 = vld [vmem:[#allocation2 + $0x2e0] sm:$0xff]
    %v175 = vld [vmem:[#allocation2 + $0x2e8] sm:$0xff]
    %v176 = vld [vmem:[#allocation2 + $0x2f0] sm:$0xff]
    %v177 = vld [vmem:[#allocation2 + $0x2f8] sm:$0xff]
    %v178 = vld [vmem:[#allocation2 + $0x300] sm:$0xff]
    %v179 = vld [vmem:[#allocation2 + $0x308] sm:$0xff]
    %v180 = vld [vmem:[#allocation2 + $0x310] sm:$0xff]
    %v181 = vld [vmem:[#allocation2 + $0x318] sm:$0xff]
    %v182 = vld [vmem:[#allocation2 + $0x320] sm:$0xff]
    %v183 = vld [vmem:[#allocation2 + $0x328] sm:$0xff]
    %v184 = vld [vmem:[#allocation2 + $0x330] sm:$0xff]
    %v185 = vld [vmem:[#allocation2 + $0x338] sm:$0xff]
    %v186 = vld [vmem:[#allocation2 + $0x340] sm:$0xff]
    %v187 = vld [vmem:[#allocation2 + $0x348] sm:$0xff]
    %v188 = vld [vmem:[#allocation2 + $0x350] sm:$0xff]
    %v189 = vld [vmem:[#allocation2 + $0x358] sm:$0xff]
    %v190 = vld [vmem:[#allocation2 + $0x360] sm:$0xff]
    %v191 = vld [vmem:[#allocation2 + $0x368] sm:$0xff]
    %v192 = vld [vmem:[#allocation2 + $0x370] sm:$0xff]
    %v193 = vld [vmem:[#allocation2 + $0x378] sm:$0xff]
    %v194 = vld [vmem:[#allocation2 + $0x380] sm:$0xff]
    %v195 = vld [vmem:[#allocation2 + $0x388] sm:$0xff]
    %v196 = vld [vmem:[#allocation2 + $0x390] sm:$0xff]
    %v197 = vld [vmem:[#allocation2 + $0x398] sm:$0xff]
    %v198 = vld [vmem:[#allocation2 + $0x3a0] sm:$0xff]
    %v199 = vld [vmem:[#allocation2 + $0x3a8] sm:$0xff]
    %v200 = vld [vmem:[#allocation2 + $0x3b0] sm:$0xff]
    %v201 = vld [vmem:[#allocation2 + $0x3b8] sm:$0xff]
    %v202 = vld [vmem:[#allocation2 + $0x3c0] sm:$0xff]
    %v203 = vld [vmem:[#allocation2 + $0x3c8] sm:$0xff]
    %v204 = vld [vmem:[#allocation2 + $0x3d0] sm:$0xff]
    %v205 = vld [vmem:[#allocation2 + $0x3d8] sm:$0xff]
    %v206 = vld [vmem:[#allocation2 + $0x3e0] sm:$0xff]
    %v207 = vld [vmem:[#allocation2 + $0x3e8] sm:$0xff]
    %v208 = vld [vmem:[#allocation2 + $0x3f0] sm:$0xff]
    %v209 = vld [vmem:[#allocation2 + $0x3f8] sm:$0xff]
    %v210 = vld [vmem:[#allocation2 + $0x400] sm:$0xff]
    %v211 = vld [vmem:[#allocation2 + $0x408] sm:$0xff]
    %v212 = vld [vmem:[#allocation2 + $0x410] sm:$0xff]
    %v213 = vld [vmem:[#allocation2 + $0x418] sm:$0xff]
    %v214 = vld [vmem:[#allocation2 + $0x420] sm:$0xff]
    %v215 = vld [vmem:[#allocation2 + $0x428] sm:$0xff]
    %v216 = vld [vmem:[#allocation2 + $0x430] sm:$0xff]
    %v217 = vld [vmem:[#allocation2 + $0x438] sm:$0xff]
    %v218 = vld [vmem:[#allocation2 + $0x440] sm:$0xff]
    %v219 = vld [vmem:[#allocation2 + $0x448] sm:$0xff]
    %v220 = vld [vmem:[#allocation2 + $0x450] sm:$0xff]
    %v221 = vld [vmem:[#allocation2 + $0x458] sm:$0xff]
    %v222 = vld [vmem:[#allocation2 + $0x460] sm:$0xff]
    %v223 = vld [vmem:[#allocation2 + $0x468] sm:$0xff]
    %v224 = vld [vmem:[#allocation2 + $0x470] sm:$0xff]
    %v225 = vld [vmem:[#allocation2 + $0x478] sm:$0xff]
    %v226 = vld [vmem:[#allocation2 + $0x480] sm:$0xff]
    %v227 = vld [vmem:[#allocation2 + $0x488] sm:$0xff]
    %v228 = vld [vmem:[#allocation2 + $0x490] sm:$0xff]
    %v229 = vld [vmem:[#allocation2 + $0x498] sm:$0xff]
    %v230 = vld [vmem:[#allocation2 + $0x4a0] sm:$0xff]
    %v231 = vld [vmem:[#allocation2 + $0x4a8] sm:$0xff]
    %v232 = vld [vmem:[#allocation2 + $0x4b0] sm:$0xff]
    %v233 = vld [vmem:[#allocation2 + $0x4b8] sm:$0xff]
    %v234 = vld [vmem:[#allocation2 + $0x4c0] sm:$0xff]
    %v235 = vld [vmem:[#allocation2 + $0x4c8] sm:$0xff]
    %v236 = vld [vmem:[#allocation2 + $0x4d0] sm:$0xff]
    %v237 = vld [vmem:[#allocation2 + $0x4d8] sm:$0xff]
    %v238 = vld [vmem:[#allocation2 + $0x4e0] sm:$0xff]
    %v239 = vld [vmem:[#allocation2 + $0x4e8] sm:$0xff]
    %v240 = vld [vmem:[#allocation2 + $0x4f0] sm:$0xff]
    %v241 = vld [vmem:[#allocation2 + $0x4f8] sm:$0xff]
    %v242 = vld [vmem:[#allocation2 + $0x500] sm:$0xff]
    %v243 = vld [vmem:[#allocation2 + $0x508] sm:$0xff]
    %v244 = vld [vmem:[#allocation2 + $0x510] sm:$0xff]
    %v245 = vld [vmem:[#allocation2 + $0x518] sm:$0xff]
    %v246 = vld [vmem:[#allocation2 + $0x520] sm:$0xff]
    %v247 = vld [vmem:[#allocation2 + $0x528] sm:$0xff]
    %v248 = vld [vmem:[#allocation2 + $0x530] sm:$0xff]
    %v249 = vld [vmem:[#allocation2 + $0x538] sm:$0xff]
    %v250 = vld [vmem:[#allocation2 + $0x540] sm:$0xff]
    %v251 = vld [vmem:[#allocation2 + $0x548] sm:$0xff]
    %v252 = vld [vmem:[#allocation2 + $0x550] sm:$0xff]
    %v253 = vld [vmem:[#allocation2 + $0x558] sm:$0xff]
    %v254 = vld [vmem:[#allocation2 + $0x560] sm:$0xff]
    %v255 = vld [vmem:[#allocation2 + $0x568] sm:$0xff]
    %v256 = vld [vmem:[#allocation2 + $0x570] sm:$0xff]
    %v257 = vld [vmem:[#allocation2 + $0x578] sm:$0xff]
    %v258 = vld [vmem:[#allocation2 + $0x580] sm:$0xff]
    %v259 = vld [vmem:[#allocation2 + $0x588] sm:$0xff]
    %v260 = vld [vmem:[#allocation2 + $0x590] sm:$0xff]
    %v261 = vld [vmem:[#allocation2 + $0x598] sm:$0xff]
    %v262 = vld [vmem:[#allocation2 + $0x5a0] sm:$0xff]
    %v263 = vld [vmem:[#allocation2 + $0x5a8] sm:$0xff]
    %v264 = vld [vmem:[#allocation2 + $0x5b0] sm:$0xff]
    %v265 = vld [vmem:[#allocation2 + $0x5b8] sm:$0xff]
    %v266 = vld [vmem:[#allocation2 + $0x5c0] sm:$0xff]
    %v267 = vld [vmem:[#allocation2 + $0x5c8] sm:$0xff]
    %v268 = vld [vmem:[#allocation2 + $0x5d0] sm:$0xff]
    %v269 = vld [vmem:[#allocation2 + $0x5d8] sm:$0xff]
    %v270 = vld [vmem:[#allocation2 + $0x5e0] sm:$0xff]
    %v271 = vld [vmem:[#allocation2 + $0x5e8] sm:$0xff]
    %v272 = vld [vmem:[#allocation2 + $0x5f0] sm:$0xff]
    %v273 = vld [vmem:[#allocation2 + $0x5f8] sm:$0xff]
    %v274 = vld [vmem:[#allocation2 + $0x600] sm:$0xff]
    %v275 = vld [vmem:[#allocation2 + $0x608] sm:$0xff]
    %v276 = vld [vmem:[#allocation2 + $0x610] sm:$0xff]
    %v277 = vld [vmem:[#allocation2 + $0x618] sm:$0xff]
    %v278 = vld [vmem:[#allocation2 + $0x620] sm:$0xff]
    %v279 = vld [vmem:[#allocation2 + $0x628] sm:$0xff]
    %v280 = vld [vmem:[#allocation2 + $0x630] sm:$0xff]
    %v281 = vld [vmem:[#allocation2 + $0x638] sm:$0xff]
    %v282 = vld [vmem:[#allocation2 + $0x640] sm:$0xff]
    %v283 = vld [vmem:[#allocation2 + $0x648] sm:$0xff]
    %v284 = vld [vmem:[#allocation2 + $0x650] sm:$0xff]
    %v285 = vld [vmem:[#allocation2 + $0x658] sm:$0xff]
    %v286 = vld [vmem:[#allocation2 + $0x660] sm:$0xff]
    %v287 = vld [vmem:[#allocation2 + $0x668] sm:$0xff]
    %v288 = vld [vmem:[#allocation2 + $0x670] sm:$0xff]
    %v289 = vld [vmem:[#allocation2 + $0x678] sm:$0xff]
    %v290 = vld [vmem:[#allocation2 + $0x680] sm:$0xff]
    %v291 = vld [vmem:[#allocation2 + $0x688] sm:$0xff]
    %v292 = vld [vmem:[#allocation2 + $0x690] sm:$0xff]
    %v293 = vld [vmem:[#allocation2 + $0x698] sm:$0xff]
    %v294 = vld [vmem:[#allocation2 + $0x6a0] sm:$0xff]
    %v295 = vld [vmem:[#allocation2 + $0x6a8] sm:$0xff]
    %v296 = vld [vmem:[#allocation2 + $0x6b0] sm:$0xff]
    %v297 = vld [vmem:[#allocation2 + $0x6b8] sm:$0xff]
    %v298 = vld [vmem:[#allocation2 + $0x6c0] sm:$0xff]
    %v299 = vld [vmem:[#allocation2 + $0x6c8] sm:$0xff]
    %v300 = vld [vmem:[#allocation2 + $0x6d0] sm:$0xff]
    %v301 = vld [vmem:[#allocation2 + $0x6d8] sm:$0xff]
    %v302 = vld [vmem:[#allocation2 + $0x6e0] sm:$0xff]
    %v303 = vld [vmem:[#allocation2 + $0x6e8] sm:$0xff]
    %v304 = vld [vmem:[#allocation2 + $0x6f0] sm:$0xff]
    %v305 = vld [vmem:[#allocation2 + $0x6f8] sm:$0xff]
    %v306 = vld [vmem:[#allocation2 + $0x700] sm:$0xff]
    %v307 = vld [vmem:[#allocation2 + $0x708] sm:$0xff]
    %v308 = vld [vmem:[#allocation2 + $0x710] sm:$0xff]
    %v309 = vld [vmem:[#allocation2 + $0x718] sm:$0xff]
    %v310 = vld [vmem:[#allocation2 + $0x720] sm:$0xff]
    %v311 = vld [vmem:[#allocation2 + $0x728] sm:$0xff]
    %v312 = vld [vmem:[#allocation2 + $0x730] sm:$0xff]
    %v313 = vld [vmem:[#allocation2 + $0x738] sm:$0xff]
    %v314 = vld [vmem:[#allocation2 + $0x740] sm:$0xff]
    %v315 = vld [vmem:[#allocation2 + $0x748] sm:$0xff]
    %v316 = vld [vmem:[#allocation2 + $0x750] sm:$0xff]
    %v317 = vld [vmem:[#allocation2 + $0x758] sm:$0xff]
    %v318 = vld [vmem:[#allocation2 + $0x760] sm:$0xff]
    %v319 = vld [vmem:[#allocation2 + $0x768] sm:$0xff]
    %v320 = vld [vmem:[#allocation2 + $0x770] sm:$0xff]
    %v321 = vld [vmem:[#allocation2 + $0x778] sm:$0xff]
    %v322 = vld [vmem:[#allocation2 + $0x780] sm:$0xff]
    %v323 = vld [vmem:[#allocation2 + $0x788] sm:$0xff]
    %v324 = vld [vmem:[#allocation2 + $0x790] sm:$0xff]
    %v325 = vld [vmem:[#allocation2 + $0x798] sm:$0xff]
    %v326 = vld [vmem:[#allocation2 + $0x7a0] sm:$0xff]
    %v327 = vld [vmem:[#allocation2 + $0x7a8] sm:$0xff]
    %v328 = vld [vmem:[#allocation2 + $0x7b0] sm:$0xff]
    %v329 = vld [vmem:[#allocation2 + $0x7b8] sm:$0xff]
    %v330 = vld [vmem:[#allocation2 + $0x7c0] sm:$0xff]
    %v331 = vld [vmem:[#allocation2 + $0x7c8] sm:$0xff]
    %v332 = vld [vmem:[#allocation2 + $0x7d0] sm:$0xff]
    %v333 = vld [vmem:[#allocation2 + $0x7d8] sm:$0xff]
    %v334 = vld [vmem:[#allocation2 + $0x7e0] sm:$0xff]
    %v335 = vld [vmem:[#allocation2 + $0x7e8] sm:$0xff]
    %v336 = vld [vmem:[#allocation2 + $0x7f0] sm:$0xff]
    %v337 = vld [vmem:[#allocation2 + $0x7f8] sm:$0xff]
    %v338 = vld [vmem:[#allocation2 + $0x800] sm:$0xff]
    %v339 = vld [vmem:[#allocation2 + $0x808] sm:$0xff]
    %v340 = vld [vmem:[#allocation2 + $0x810] sm:$0xff]
    %v341 = vld [vmem:[#allocation2 + $0x818] sm:$0xff]
    %v342 = vld [vmem:[#allocation2 + $0x820] sm:$0xff]
    %v343 = vld [vmem:[#allocation2 + $0x828] sm:$0xff]
    %v344 = vld [vmem:[#allocation2 + $0x830] sm:$0xff]
    %v345 = vld [vmem:[#allocation2 + $0x838] sm:$0xff]
    %v346 = vld [vmem:[#allocation2 + $0x840] sm:$0xff]
    %v347 = vld [vmem:[#allocation2 + $0x848] sm:$0xff]
    %v348 = vld [vmem:[#allocation2 + $0x850] sm:$0xff]
    %v349 = vld [vmem:[#allocation2 + $0x858] sm:$0xff]
    %v350 = vld [vmem:[#allocation2 + $0x860] sm:$0xff]
    %v351 = vld [vmem:[#allocation2 + $0x868] sm:$0xff]
    %v352 = vld [vmem:[#allocation2 + $0x870] sm:$0xff]
    %v353 = vld [vmem:[#allocation2 + $0x878] sm:$0xff]
    %v354 = vld [vmem:[#allocation2 + $0x880] sm:$0xff]
    %v355 = vld [vmem:[#allocation2 + $0x888] sm:$0xff]
    %v356 = vld [vmem:[#allocation2 + $0x890] sm:$0xff]
    %v357 = vld [vmem:[#allocation2 + $0x898] sm:$0xff]
    %v358 = vld [vmem:[#allocation2 + $0x8a0] sm:$0xff]
    %v359 = vld [vmem:[#allocation2 + $0x8a8] sm:$0xff]
    %v360 = vld [vmem:[#allocation2 + $0x8b0] sm:$0xff]
    %v361 = vld [vmem:[#allocation2 + $0x8b8] sm:$0xff]
    %v362 = vld [vmem:[#allocation2 + $0x8c0] sm:$0xff]
    %v363 = vld [vmem:[#allocation2 + $0x8c8] sm:$0xff]
    %v364 = vld [vmem:[#allocation2 + $0x8d0] sm:$0xff]
    %v365 = vld [vmem:[#allocation2 + $0x8d8] sm:$0xff]
    %v366 = vld [vmem:[#allocation2 + $0x8e0] sm:$0xff]
    %v367 = vld [vmem:[#allocation2 + $0x8e8] sm:$0xff]
    %v368 = vld [vmem:[#allocation2 + $0x8f0] sm:$0xff]
    %v369 = vld [vmem:[#allocation2 + $0x8f8] sm:$0xff]
    %v370 = vld [vmem:[#allocation2 + $0x900] sm:$0xff]
    %v371 = vld [vmem:[#allocation2 + $0x908] sm:$0xff]
    %v372 = vld [vmem:[#allocation2 + $0x910] sm:$0xff]
    %v373 = vld [vmem:[#allocation2 + $0x918] sm:$0xff]
    %v374 = vld [vmem:[#allocation2 + $0x920] sm:$0xff]
    %v375 = vld [vmem:[#allocation2 + $0x928] sm:$0xff]
    %v376 = vld [vmem:[#allocation4] sm:$0x3]
    %v378 = vlaneseq
    %v379 = vshrl.u32 %v378, 7
    %v380 = vsub.s32 0, %v379
    %v381 = vrot.slane %v376, %v380
    %v382 = vlaneseq
    %v383 = vshrl.u32 %v382, 7
    %v384 = vsub.s32 1, %v383
    %v385 = vrot.slane %v376, %v384
    %v398 = vunpack.c.l.b16 %v72
    %v399 = vunpack.c.h.b16 %v72
    %v400 = vunpack.c.l.b16 %v73
    %v401 = vunpack.c.h.b16 %v73
    %v402 = vunpack.c.l.b16 %v74
    %v403 = vunpack.c.h.b16 %v74
    %v404 = vunpack.c.l.b16 %v75
    %v405 = vunpack.c.h.b16 %v75
    %v406 = vunpack.c.l.b16 %v76
    %v407 = vunpack.c.h.b16 %v76
    %v408 = vunpack.c.l.b16 %v77
    %v409 = vunpack.c.h.b16 %v77
    %v410 = vunpack.c.l.b16 %v78
    %v411 = vunpack.c.h.b16 %v78
    %v412 = vunpack.c.l.b16 %v79
    %v413 = vunpack.c.h.b16 %v79
    %v414 = vunpack.c.l.b16 %v80
    %v415 = vunpack.c.h.b16 %v80
    %v416 = vunpack.c.l.b16 %v81
    %v417 = vpack.c.b16 %v398, %v398
    %v418 = vpack.c.b16 %v399, %v399
    %v419 = vpack.c.b16 %v400, %v400
    %v420 = vpack.c.b16 %v401, %v401
    %v421 = vpack.c.b16 %v402, %v402
    %v422 = vpack.c.b16 %v403, %v403
    %v423 = vpack.c.b16 %v404, %v404
    %v424 = vpack.c.b16 %v405, %v405
    %v425 = vpack.c.b16 %v406, %v406
    %v426 = vpack.c.b16 %v407, %v407
    %v427 = vpack.c.b16 %v408, %v408
    %v428 = vpack.c.b16 %v409, %v409
    %v429 = vpack.c.b16 %v410, %v410
    %v430 = vpack.c.b16 %v411, %v411
    %v431 = vpack.c.b16 %v412, %v412
    %v432 = vpack.c.b16 %v413, %v413
    %v433 = vpack.c.b16 %v414, %v414
    %v434 = vpack.c.b16 %v415, %v415
    %v435 = vpack.c.b16 %v416, %v416
    %v748 = vunpack.c.l.b16 %v82
    %v749 = vunpack.c.h.b16 %v82
    %v750 = vunpack.c.l.b16 %v83
    %v751 = vunpack.c.h.b16 %v83
    %v752 = vunpack.c.l.b16 %v84
    %v753 = vunpack.c.h.b16 %v84
    %v754 = vunpack.c.l.b16 %v85
    %v755 = vunpack.c.h.b16 %v85
    %v756 = vunpack.c.l.b16 %v86
    %v757 = vunpack.c.h.b16 %v86
    %v758 = vunpack.c.l.b16 %v87
    %v759 = vunpack.c.h.b16 %v87
    %v760 = vunpack.c.l.b16 %v88
    %v761 = vunpack.c.h.b16 %v88
    %v762 = vunpack.c.l.b16 %v89
    %v763 = vunpack.c.h.b16 %v89
    %v764 = vunpack.c.l.b16 %v90
    %v765 = vunpack.c.h.b16 %v90
    %v766 = vunpack.c.l.b16 %v91
    %v767 = vunpack.c.h.b16 %v91
    %v768 = vunpack.c.l.b16 %v92
    %v769 = vunpack.c.h.b16 %v92
    %v770 = vunpack.c.l.b16 %v93
    %v771 = vunpack.c.h.b16 %v93
    %v772 = vunpack.c.l.b16 %v94
    %v773 = vunpack.c.h.b16 %v94
    %v774 = vunpack.c.l.b16 %v95
    %v775 = vunpack.c.h.b16 %v95
    %v776 = vunpack.c.l.b16 %v96
    %v777 = vunpack.c.h.b16 %v96
    %v778 = vunpack.c.l.b16 %v97
    %v779 = vunpack.c.h.b16 %v97
    %v780 = vunpack.c.l.b16 %v98
    %v781 = vunpack.c.h.b16 %v98
    %v782 = vunpack.c.l.b16 %v99
    %v783 = vunpack.c.h.b16 %v99
    %v784 = vunpack.c.l.b16 %v100
    %v785 = vunpack.c.h.b16 %v100
    %v786 = vunpack.c.l.b16 %v101
    %v787 = vunpack.c.h.b16 %v101
    %v788 = vunpack.c.l.b16 %v102
    %v789 = vunpack.c.h.b16 %v102
    %v790 = vunpack.c.l.b16 %v103
    %v791 = vunpack.c.h.b16 %v103
    %v792 = vunpack.c.l.b16 %v104
    %v793 = vunpack.c.h.b16 %v104
    %v794 = vunpack.c.l.b16 %v105
    %v795 = vunpack.c.h.b16 %v105
    %v796 = vunpack.c.l.b16 %v106
    %v797 = vunpack.c.h.b16 %v106
    %v798 = vunpack.c.l.b16 %v107
    %v799 = vunpack.c.h.b16 %v107
    %v800 = vunpack.c.l.b16 %v108
    %v801 = vunpack.c.h.b16 %v108
    %v802 = vunpack.c.l.b16 %v109
    %v803 = vunpack.c.h.b16 %v109
    %v804 = vunpack.c.l.b16 %v110
    %v805 = vunpack.c.h.b16 %v110
    %v806 = vunpack.c.l.b16 %v111
    %v807 = vunpack.c.h.b16 %v111
    %v808 = vunpack.c.l.b16 %v112
    %v809 = vunpack.c.h.b16 %v112
    %v810 = vunpack.c.l.b16 %v113
    %v811 = vunpack.c.h.b16 %v113
    %v812 = vunpack.c.l.b16 %v114
    %v813 = vunpack.c.h.b16 %v114
    %v814 = vunpack.c.l.b16 %v115
    %v815 = vunpack.c.h.b16 %v115
    %v816 = vunpack.c.l.b16 %v116
    %v817 = vunpack.c.h.b16 %v116
    %v818 = vunpack.c.l.b16 %v117
    %v819 = vunpack.c.h.b16 %v117
    %v820 = vunpack.c.l.b16 %v118
    %v821 = vunpack.c.h.b16 %v118
    %v822 = vunpack.c.l.b16 %v119
    %v823 = vunpack.c.h.b16 %v119
    %v824 = vunpack.c.l.b16 %v120
    %v825 = vunpack.c.h.b16 %v120
    %v826 = vunpack.c.l.b16 %v121
    %v827 = vunpack.c.h.b16 %v121
    %v828 = vunpack.c.l.b16 %v122
    %v829 = vunpack.c.h.b16 %v122
    %v830 = vunpack.c.l.b16 %v123
    %v831 = vunpack.c.h.b16 %v123
    %v832 = vunpack.c.l.b16 %v124
    %v833 = vunpack.c.h.b16 %v124
    %v834 = vunpack.c.l.b16 %v125
    %v835 = vunpack.c.h.b16 %v125
    %v836 = vunpack.c.l.b16 %v126
    %v837 = vunpack.c.h.b16 %v126
    %v838 = vunpack.c.l.b16 %v127
    %v839 = vunpack.c.h.b16 %v127
    %v840 = vunpack.c.l.b16 %v128
    %v841 = vunpack.c.h.b16 %v128
    %v842 = vunpack.c.l.b16 %v129
    %v843 = vunpack.c.h.b16 %v129
    %v844 = vunpack.c.l.b16 %v130
    %v845 = vunpack.c.h.b16 %v130
    %v846 = vunpack.c.l.b16 %v131
    %v847 = vunpack.c.h.b16 %v131
    %v848 = vunpack.c.l.b16 %v132
    %v849 = vunpack.c.h.b16 %v132
    %v850 = vunpack.c.l.b16 %v133
    %v851 = vunpack.c.h.b16 %v133
    %v852 = vunpack.c.l.b16 %v134
    %v853 = vunpack.c.h.b16 %v134
    %v854 = vunpack.c.l.b16 %v135
    %v855 = vunpack.c.h.b16 %v135
    %v856 = vunpack.c.l.b16 %v136
    %v857 = vunpack.c.h.b16 %v136
    %v858 = vunpack.c.l.b16 %v137
    %v859 = vunpack.c.h.b16 %v137
    %v860 = vunpack.c.l.b16 %v138
    %v861 = vunpack.c.h.b16 %v138
    %v862 = vunpack.c.l.b16 %v139
    %v863 = vunpack.c.h.b16 %v139
    %v864 = vunpack.c.l.b16 %v140
    %v865 = vunpack.c.h.b16 %v140
    %v866 = vunpack.c.l.b16 %v141
    %v867 = vunpack.c.h.b16 %v141
    %v868 = vunpack.c.l.b16 %v142
    %v869 = vunpack.c.h.b16 %v142
    %v870 = vunpack.c.l.b16 %v143
    %v871 = vunpack.c.h.b16 %v143
    %v872 = vunpack.c.l.b16 %v144
    %v873 = vunpack.c.h.b16 %v144
    %v874 = vunpack.c.l.b16 %v145
    %v875 = vunpack.c.h.b16 %v145
    %v876 = vunpack.c.l.b16 %v146
    %v877 = vunpack.c.h.b16 %v146
    %v878 = vunpack.c.l.b16 %v147
    %v879 = vunpack.c.h.b16 %v147
    %v880 = vunpack.c.l.b16 %v148
    %v881 = vunpack.c.h.b16 %v148
    %v882 = vunpack.c.l.b16 %v149
    %v883 = vunpack.c.h.b16 %v149
    %v884 = vunpack.c.l.b16 %v150
    %v885 = vunpack.c.h.b16 %v150
    %v886 = vunpack.c.l.b16 %v151
    %v887 = vunpack.c.h.b16 %v151
    %v888 = vunpack.c.l.b16 %v152
    %v889 = vunpack.c.h.b16 %v152
    %v890 = vunpack.c.l.b16 %v153
    %v891 = vunpack.c.h.b16 %v153
    %v892 = vunpack.c.l.b16 %v154
    %v893 = vunpack.c.h.b16 %v154
    %v894 = vunpack.c.l.b16 %v155
    %v895 = vunpack.c.h.b16 %v155
    %v896 = vunpack.c.l.b16 %v156
    %v897 = vunpack.c.h.b16 %v156
    %v898 = vunpack.c.l.b16 %v157
    %v899 = vunpack.c.h.b16 %v157
    %v900 = vunpack.c.l.b16 %v158
    %v901 = vunpack.c.h.b16 %v158
    %v902 = vunpack.c.l.b16 %v159
    %v903 = vunpack.c.h.b16 %v159
    %v904 = vunpack.c.l.b16 %v160
    %v905 = vunpack.c.h.b16 %v160
    %v906 = vunpack.c.l.b16 %v161
    %v907 = vunpack.c.h.b16 %v161
    %v908 = vunpack.c.l.b16 %v162
    %v909 = vunpack.c.h.b16 %v162
    %v910 = vunpack.c.l.b16 %v163
    %v911 = vunpack.c.h.b16 %v163
    %v912 = vunpack.c.l.b16 %v164
    %v913 = vunpack.c.h.b16 %v164
    %v914 = vunpack.c.l.b16 %v165
    %v915 = vunpack.c.h.b16 %v165
    %v916 = vunpack.c.l.b16 %v166
    %v917 = vunpack.c.h.b16 %v166
    %v918 = vunpack.c.l.b16 %v167
    %v919 = vunpack.c.h.b16 %v167
    %v920 = vunpack.c.l.b16 %v168
    %v921 = vunpack.c.h.b16 %v168
    %v922 = vunpack.c.l.b16 %v169
    %v923 = vunpack.c.h.b16 %v169
    %v924 = vunpack.c.l.b16 %v170
    %v925 = vunpack.c.h.b16 %v170
    %v926 = vunpack.c.l.b16 %v171
    %v927 = vunpack.c.h.b16 %v171
    %v928 = vunpack.c.l.b16 %v172
    %v929 = vunpack.c.h.b16 %v172
    %v930 = vunpack.c.l.b16 %v173
    %v931 = vunpack.c.h.b16 %v173
    %v932 = vunpack.c.l.b16 %v174
    %v933 = vunpack.c.h.b16 %v174
    %v934 = vunpack.c.l.b16 %v175
    %v935 = vunpack.c.h.b16 %v175
    %v936 = vunpack.c.l.b16 %v176
    %v937 = vunpack.c.h.b16 %v176
    %v938 = vunpack.c.l.b16 %v177
    %v939 = vunpack.c.h.b16 %v177
    %v940 = vunpack.c.l.b16 %v178
    %v941 = vunpack.c.h.b16 %v178
    %v942 = vunpack.c.l.b16 %v179
    %v943 = vunpack.c.h.b16 %v179
    %v944 = vunpack.c.l.b16 %v180
    %v945 = vunpack.c.h.b16 %v180
    %v946 = vunpack.c.l.b16 %v181
    %v947 = vunpack.c.h.b16 %v181
    %v948 = vunpack.c.l.b16 %v182
    %v949 = vunpack.c.h.b16 %v182
    %v950 = vunpack.c.l.b16 %v183
    %v951 = vunpack.c.h.b16 %v183
    %v952 = vunpack.c.l.b16 %v184
    %v953 = vunpack.c.h.b16 %v184
    %v954 = vunpack.c.l.b16 %v185
    %v955 = vunpack.c.h.b16 %v185
    %v956 = vunpack.c.l.b16 %v186
    %v957 = vunpack.c.h.b16 %v186
    %v958 = vunpack.c.l.b16 %v187
    %v959 = vunpack.c.h.b16 %v187
    %v960 = vunpack.c.l.b16 %v188
    %v961 = vunpack.c.h.b16 %v188
    %v962 = vunpack.c.l.b16 %v189
    %v963 = vunpack.c.h.b16 %v189
    %v964 = vunpack.c.l.b16 %v190
    %v965 = vunpack.c.h.b16 %v190
    %v966 = vunpack.c.l.b16 %v191
    %v967 = vunpack.c.h.b16 %v191
    %v968 = vunpack.c.l.b16 %v192
    %v969 = vunpack.c.h.b16 %v192
    %v970 = vunpack.c.l.b16 %v193
    %v971 = vunpack.c.h.b16 %v193
    %v972 = vunpack.c.l.b16 %v194
    %v973 = vunpack.c.h.b16 %v194
    %v974 = vunpack.c.l.b16 %v195
    %v975 = vunpack.c.h.b16 %v195
    %v976 = vunpack.c.l.b16 %v196
    %v977 = vunpack.c.h.b16 %v196
    %v978 = vunpack.c.l.b16 %v197
    %v979 = vunpack.c.h.b16 %v197
    %v980 = vunpack.c.l.b16 %v198
    %v981 = vunpack.c.h.b16 %v198
    %v982 = vunpack.c.l.b16 %v199
    %v983 = vunpack.c.h.b16 %v199
    %v984 = vunpack.c.l.b16 %v200
    %v985 = vunpack.c.h.b16 %v200
    %v986 = vunpack.c.l.b16 %v201
    %v987 = vunpack.c.h.b16 %v201
    %v988 = vunpack.c.l.b16 %v202
    %v989 = vunpack.c.h.b16 %v202
    %v990 = vunpack.c.l.b16 %v203
    %v991 = vunpack.c.h.b16 %v203
    %v992 = vunpack.c.l.b16 %v204
    %v993 = vunpack.c.h.b16 %v204
    %v994 = vunpack.c.l.b16 %v205
    %v995 = vunpack.c.h.b16 %v205
    %v996 = vunpack.c.l.b16 %v206
    %v997 = vunpack.c.h.b16 %v206
    %v998 = vunpack.c.l.b16 %v207
    %v999 = vunpack.c.h.b16 %v207
    %v1000 = vunpack.c.l.b16 %v208
    %v1001 = vunpack.c.h.b16 %v208
    %v1002 = vunpack.c.l.b16 %v209
    %v1003 = vunpack.c.h.b16 %v209
    %v1004 = vunpack.c.l.b16 %v210
    %v1005 = vunpack.c.h.b16 %v210
    %v1006 = vunpack.c.l.b16 %v211
    %v1007 = vunpack.c.h.b16 %v211
    %v1008 = vunpack.c.l.b16 %v212
    %v1009 = vunpack.c.h.b16 %v212
    %v1010 = vunpack.c.l.b16 %v213
    %v1011 = vunpack.c.h.b16 %v213
    %v1012 = vunpack.c.l.b16 %v214
    %v1013 = vunpack.c.h.b16 %v214
    %v1014 = vunpack.c.l.b16 %v215
    %v1015 = vunpack.c.h.b16 %v215
    %v1016 = vunpack.c.l.b16 %v216
    %v1017 = vunpack.c.h.b16 %v216
    %v1018 = vunpack.c.l.b16 %v217
    %v1019 = vunpack.c.h.b16 %v217
    %v1020 = vunpack.c.l.b16 %v218
    %v1021 = vunpack.c.h.b16 %v218
    %v1022 = vunpack.c.l.b16 %v219
    %v1023 = vunpack.c.h.b16 %v219
    %v1024 = vunpack.c.l.b16 %v220
    %v1025 = vunpack.c.h.b16 %v220
    %v1026 = vunpack.c.l.b16 %v221
    %v1027 = vunpack.c.h.b16 %v221
    %v1028 = vunpack.c.l.b16 %v222
    %v1029 = vunpack.c.h.b16 %v222
    %v1030 = vunpack.c.l.b16 %v223
    %v1031 = vunpack.c.h.b16 %v223
    %v1032 = vunpack.c.l.b16 %v224
    %v1033 = vunpack.c.h.b16 %v224
    %v1034 = vunpack.c.l.b16 %v225
    %v1035 = vunpack.c.h.b16 %v225
    %v1036 = vunpack.c.l.b16 %v226
    %v1037 = vunpack.c.h.b16 %v226
    %v1038 = vunpack.c.l.b16 %v227
    %v1039 = vunpack.c.h.b16 %v227
    %v1040 = vunpack.c.l.b16 %v228
    %v1041 = vunpack.c.h.b16 %v228
    %v1042 = vunpack.c.l.b16 %v229
    %v1043 = vunpack.c.h.b16 %v229
    %v1044 = vunpack.c.l.b16 %v230
    %v1045 = vunpack.c.h.b16 %v230
    %v1046 = vunpack.c.l.b16 %v231
    %v1047 = vunpack.c.h.b16 %v231
    %v1048 = vunpack.c.l.b16 %v232
    %v1049 = vunpack.c.h.b16 %v232
    %v1050 = vunpack.c.l.b16 %v233
    %v1051 = vunpack.c.h.b16 %v233
    %v1052 = vunpack.c.l.b16 %v234
    %v1053 = vunpack.c.h.b16 %v234
    %v1054 = vunpack.c.l.b16 %v235
    %v1055 = vunpack.c.h.b16 %v235
    %v1056 = vunpack.c.l.b16 %v236
    %v1057 = vunpack.c.h.b16 %v236
    %v1058 = vunpack.c.l.b16 %v237
    %v1059 = vunpack.c.h.b16 %v237
    %v1060 = vunpack.c.l.b16 %v238
    %v1061 = vunpack.c.h.b16 %v238
    %v1062 = vunpack.c.l.b16 %v239
    %v1063 = vunpack.c.h.b16 %v239
    %v1064 = vunpack.c.l.b16 %v240
    %v1065 = vunpack.c.h.b16 %v240
    %v1066 = vunpack.c.l.b16 %v241
    %v1067 = vunpack.c.h.b16 %v241
    %v1068 = vunpack.c.l.b16 %v242
    %v1069 = vunpack.c.h.b16 %v242
    %v1070 = vunpack.c.l.b16 %v243
    %v1071 = vunpack.c.h.b16 %v243
    %v1072 = vunpack.c.l.b16 %v244
    %v1073 = vunpack.c.h.b16 %v244
    %v1074 = vunpack.c.l.b16 %v245
    %v1075 = vunpack.c.h.b16 %v245
    %v1076 = vunpack.c.l.b16 %v246
    %v1077 = vunpack.c.h.b16 %v246
    %v1078 = vunpack.c.l.b16 %v247
    %v1079 = vunpack.c.h.b16 %v247
    %v1080 = vunpack.c.l.b16 %v248
    %v1081 = vunpack.c.h.b16 %v248
    %v1082 = vunpack.c.l.b16 %v249
    %v1083 = vunpack.c.h.b16 %v249
    %v1084 = vunpack.c.l.b16 %v250
    %v1085 = vunpack.c.h.b16 %v250
    %v1086 = vunpack.c.l.b16 %v251
    %v1087 = vunpack.c.h.b16 %v251
    %v1088 = vunpack.c.l.b16 %v252
    %v1089 = vunpack.c.h.b16 %v252
    %v1090 = vunpack.c.l.b16 %v253
    %v1091 = vunpack.c.h.b16 %v253
    %v1092 = vunpack.c.l.b16 %v254
    %v1093 = vunpack.c.h.b16 %v254
    %v1094 = vunpack.c.l.b16 %v255
    %v1095 = vunpack.c.h.b16 %v255
    %v1096 = vunpack.c.l.b16 %v256
    %v1097 = vunpack.c.h.b16 %v256
    %v1098 = vunpack.c.l.b16 %v257
    %v1099 = vunpack.c.h.b16 %v257
    %v1100 = vunpack.c.l.b16 %v258
    %v1101 = vunpack.c.h.b16 %v258
    %v1102 = vunpack.c.l.b16 %v259
    %v1103 = vunpack.c.h.b16 %v259
    %v1104 = vunpack.c.l.b16 %v260
    %v1105 = vunpack.c.h.b16 %v260
    %v1106 = vunpack.c.l.b16 %v261
    %v1107 = vunpack.c.h.b16 %v261
    %v1108 = vunpack.c.l.b16 %v262
    %v1109 = vunpack.c.h.b16 %v262
    %v1110 = vunpack.c.l.b16 %v263
    %v1111 = vunpack.c.h.b16 %v263
    %v1112 = vunpack.c.l.b16 %v264
    %v1113 = vunpack.c.h.b16 %v264
    %v1114 = vunpack.c.l.b16 %v265
    %v1115 = vunpack.c.h.b16 %v265
    %v1116 = vunpack.c.l.b16 %v266
    %v1117 = vunpack.c.h.b16 %v266
    %v1118 = vunpack.c.l.b16 %v267
    %v1119 = vunpack.c.h.b16 %v267
    %v1120 = vunpack.c.l.b16 %v268
    %v1121 = vunpack.c.h.b16 %v268
    %v1122 = vunpack.c.l.b16 %v269
    %v1123 = vunpack.c.h.b16 %v269
    %v1124 = vunpack.c.l.b16 %v270
    %v1125 = vunpack.c.h.b16 %v270
    %v1126 = vunpack.c.l.b16 %v271
    %v1127 = vunpack.c.h.b16 %v271
    %v1128 = vunpack.c.l.b16 %v272
    %v1129 = vunpack.c.h.b16 %v272
    %v1130 = vunpack.c.l.b16 %v273
    %v1131 = vunpack.c.h.b16 %v273
    %v1132 = vunpack.c.l.b16 %v274
    %v1133 = vunpack.c.h.b16 %v274
    %v1134 = vunpack.c.l.b16 %v275
    %v1135 = vunpack.c.h.b16 %v275
    %v1136 = vunpack.c.l.b16 %v276
    %v1137 = vunpack.c.h.b16 %v276
    %v1138 = vunpack.c.l.b16 %v277
    %v1139 = vunpack.c.h.b16 %v277
    %v1140 = vunpack.c.l.b16 %v278
    %v1141 = vunpack.c.h.b16 %v278
    %v1142 = vunpack.c.l.b16 %v279
    %v1143 = vunpack.c.h.b16 %v279
    %v1144 = vunpack.c.l.b16 %v280
    %v1145 = vunpack.c.h.b16 %v280
    %v1146 = vunpack.c.l.b16 %v281
    %v1147 = vunpack.c.h.b16 %v281
    %v1148 = vunpack.c.l.b16 %v282
    %v1149 = vunpack.c.h.b16 %v282
    %v1150 = vunpack.c.l.b16 %v283
    %v1151 = vunpack.c.h.b16 %v283
    %v1152 = vunpack.c.l.b16 %v284
    %v1153 = vunpack.c.h.b16 %v284
    %v1154 = vunpack.c.l.b16 %v285
    %v1155 = vunpack.c.h.b16 %v285
    %v1156 = vunpack.c.l.b16 %v286
    %v1157 = vunpack.c.h.b16 %v286
    %v1158 = vunpack.c.l.b16 %v287
    %v1159 = vunpack.c.h.b16 %v287
    %v1160 = vunpack.c.l.b16 %v288
    %v1161 = vunpack.c.h.b16 %v288
    %v1162 = vunpack.c.l.b16 %v289
    %v1163 = vunpack.c.h.b16 %v289
    %v1164 = vunpack.c.l.b16 %v290
    %v1165 = vunpack.c.h.b16 %v290
    %v1166 = vunpack.c.l.b16 %v291
    %v1167 = vunpack.c.h.b16 %v291
    %v1168 = vunpack.c.l.b16 %v292
    %v1169 = vunpack.c.h.b16 %v292
    %v1170 = vunpack.c.l.b16 %v293
    %v1171 = vunpack.c.h.b16 %v293
    %v1172 = vunpack.c.l.b16 %v294
    %v1173 = vunpack.c.h.b16 %v294
    %v1174 = vunpack.c.l.b16 %v295
    %v1175 = vunpack.c.h.b16 %v295
    %v1176 = vunpack.c.l.b16 %v296
    %v1177 = vunpack.c.h.b16 %v296
    %v1178 = vunpack.c.l.b16 %v297
    %v1179 = vunpack.c.h.b16 %v297
    %v1180 = vunpack.c.l.b16 %v298
    %v1181 = vunpack.c.h.b16 %v298
    %v1182 = vunpack.c.l.b16 %v299
    %v1183 = vunpack.c.h.b16 %v299
    %v1184 = vunpack.c.l.b16 %v300
    %v1185 = vunpack.c.h.b16 %v300
    %v1186 = vunpack.c.l.b16 %v301
    %v1187 = vunpack.c.h.b16 %v301
    %v1188 = vunpack.c.l.b16 %v302
    %v1189 = vunpack.c.h.b16 %v302
    %v1190 = vunpack.c.l.b16 %v303
    %v1191 = vunpack.c.h.b16 %v303
    %v1192 = vunpack.c.l.b16 %v304
    %v1193 = vunpack.c.h.b16 %v304
    %v1194 = vunpack.c.l.b16 %v305
    %v1195 = vunpack.c.h.b16 %v305
    %v1196 = vunpack.c.l.b16 %v306
    %v1197 = vunpack.c.h.b16 %v306
    %v1198 = vunpack.c.l.b16 %v307
    %v1199 = vunpack.c.h.b16 %v307
    %v1200 = vunpack.c.l.b16 %v308
    %v1201 = vunpack.c.h.b16 %v308
    %v1202 = vunpack.c.l.b16 %v309
    %v1203 = vunpack.c.h.b16 %v309
    %v1204 = vunpack.c.l.b16 %v310
    %v1205 = vunpack.c.h.b16 %v310
    %v1206 = vunpack.c.l.b16 %v311
    %v1207 = vunpack.c.h.b16 %v311
    %v1208 = vunpack.c.l.b16 %v312
    %v1209 = vunpack.c.h.b16 %v312
    %v1210 = vunpack.c.l.b16 %v313
    %v1211 = vunpack.c.h.b16 %v313
    %v1212 = vunpack.c.l.b16 %v314
    %v1213 = vunpack.c.h.b16 %v314
    %v1214 = vunpack.c.l.b16 %v315
    %v1215 = vunpack.c.h.b16 %v315
    %v1216 = vunpack.c.l.b16 %v316
    %v1217 = vunpack.c.h.b16 %v316
    %v1218 = vunpack.c.l.b16 %v317
    %v1219 = vunpack.c.h.b16 %v317
    %v1220 = vunpack.c.l.b16 %v318
    %v1221 = vunpack.c.h.b16 %v318
    %v1222 = vunpack.c.l.b16 %v319
    %v1223 = vunpack.c.h.b16 %v319
    %v1224 = vunpack.c.l.b16 %v320
    %v1225 = vunpack.c.h.b16 %v320
    %v1226 = vunpack.c.l.b16 %v321
    %v1227 = vunpack.c.h.b16 %v321
    %v1228 = vunpack.c.l.b16 %v322
    %v1229 = vunpack.c.h.b16 %v322
    %v1230 = vunpack.c.l.b16 %v323
    %v1231 = vunpack.c.h.b16 %v323
    %v1232 = vunpack.c.l.b16 %v324
    %v1233 = vunpack.c.h.b16 %v324
    %v1234 = vunpack.c.l.b16 %v325
    %v1235 = vunpack.c.h.b16 %v325
    %v1236 = vunpack.c.l.b16 %v326
    %v1237 = vunpack.c.h.b16 %v326
    %v1238 = vunpack.c.l.b16 %v327
    %v1239 = vunpack.c.h.b16 %v327
    %v1240 = vunpack.c.l.b16 %v328
    %v1241 = vunpack.c.h.b16 %v328
    %v1242 = vunpack.c.l.b16 %v329
    %v1243 = vunpack.c.h.b16 %v329
    %v1244 = vunpack.c.l.b16 %v330
    %v1245 = vunpack.c.h.b16 %v330
    %v1246 = vunpack.c.l.b16 %v331
    %v1247 = vunpack.c.h.b16 %v331
    %v1248 = vunpack.c.l.b16 %v332
    %v1249 = vunpack.c.h.b16 %v332
    %v1250 = vunpack.c.l.b16 %v333
    %v1251 = vunpack.c.h.b16 %v333
    %v1252 = vunpack.c.l.b16 %v334
    %v1253 = vunpack.c.h.b16 %v334
    %v1254 = vunpack.c.l.b16 %v335
    %v1255 = vunpack.c.h.b16 %v335
    %v1256 = vunpack.c.l.b16 %v336
    %v1257 = vunpack.c.h.b16 %v336
    %v1258 = vunpack.c.l.b16 %v337
    %v1259 = vunpack.c.h.b16 %v337
    %v1260 = vunpack.c.l.b16 %v338
    %v1261 = vunpack.c.h.b16 %v338
    %v1262 = vunpack.c.l.b16 %v339
    %v1263 = vunpack.c.h.b16 %v339
    %v1264 = vunpack.c.l.b16 %v340
    %v1265 = vunpack.c.h.b16 %v340
    %v1266 = vunpack.c.l.b16 %v341
    %v1267 = vunpack.c.h.b16 %v341
    %v1268 = vunpack.c.l.b16 %v342
    %v1269 = vunpack.c.h.b16 %v342
    %v1270 = vunpack.c.l.b16 %v343
    %v1271 = vunpack.c.h.b16 %v343
    %v1272 = vunpack.c.l.b16 %v344
    %v1273 = vunpack.c.h.b16 %v344
    %v1274 = vunpack.c.l.b16 %v345
    %v1275 = vunpack.c.h.b16 %v345
    %v1276 = vunpack.c.l.b16 %v346
    %v1277 = vunpack.c.h.b16 %v346
    %v1278 = vunpack.c.l.b16 %v347
    %v1279 = vunpack.c.h.b16 %v347
    %v1280 = vunpack.c.l.b16 %v348
    %v1281 = vunpack.c.h.b16 %v348
    %v1282 = vunpack.c.l.b16 %v349
    %v1283 = vunpack.c.h.b16 %v349
    %v1284 = vunpack.c.l.b16 %v350
    %v1285 = vunpack.c.h.b16 %v350
    %v1286 = vunpack.c.l.b16 %v351
    %v1287 = vunpack.c.h.b16 %v351
    %v1288 = vunpack.c.l.b16 %v352
    %v1289 = vunpack.c.h.b16 %v352
    %v1290 = vunpack.c.l.b16 %v353
    %v1291 = vunpack.c.h.b16 %v353
    %v1292 = vunpack.c.l.b16 %v354
    %v1293 = vunpack.c.h.b16 %v354
    %v1294 = vunpack.c.l.b16 %v355
    %v1295 = vunpack.c.h.b16 %v355
    %v1296 = vunpack.c.l.b16 %v356
    %v1297 = vunpack.c.h.b16 %v356
    %v1298 = vunpack.c.l.b16 %v357
    %v1299 = vunpack.c.h.b16 %v357
    %v1300 = vunpack.c.l.b16 %v358
    %v1301 = vunpack.c.h.b16 %v358
    %v1302 = vunpack.c.l.b16 %v359
    %v1303 = vunpack.c.h.b16 %v359
    %v1304 = vunpack.c.l.b16 %v360
    %v1305 = vunpack.c.h.b16 %v360
    %v1306 = vunpack.c.l.b16 %v361
    %v1307 = vunpack.c.h.b16 %v361
    %v1308 = vunpack.c.l.b16 %v362
    %v1309 = vunpack.c.h.b16 %v362
    %v1310 = vunpack.c.l.b16 %v363
    %v1311 = vunpack.c.h.b16 %v363
    %v1312 = vunpack.c.l.b16 %v364
    %v1313 = vunpack.c.h.b16 %v364
    %v1314 = vunpack.c.l.b16 %v365
    %v1315 = vunpack.c.h.b16 %v365
    %v1316 = vunpack.c.l.b16 %v366
    %v1317 = vunpack.c.h.b16 %v366
    %v1318 = vunpack.c.l.b16 %v367
    %v1319 = vunpack.c.h.b16 %v367
    %v1320 = vunpack.c.l.b16 %v368
    %v1321 = vunpack.c.h.b16 %v368
    %v1322 = vunpack.c.l.b16 %v369
    %v1323 = vunpack.c.h.b16 %v369
    %v1324 = vunpack.c.l.b16 %v370
    %v1325 = vunpack.c.h.b16 %v370
    %v1326 = vunpack.c.l.b16 %v371
    %v1327 = vunpack.c.h.b16 %v371
    %v1328 = vunpack.c.l.b16 %v372
    %v1329 = vunpack.c.h.b16 %v372
    %v1330 = vunpack.c.l.b16 %v373
    %v1331 = vunpack.c.h.b16 %v373
    %v1332 = vunpack.c.l.b16 %v374
    %v1333 = vunpack.c.h.b16 %v374
    %v1334 = vunpack.c.l.b16 %v375
    %v1335 = vunpack.c.h.b16 %v375
    %v1336 = vpack.c.b16 %v750, %v748
    %v1337 = vpack.c.b16 %v751, %v749
    %v1338 = vpack.c.b16 %v754, %v752
    %v1339 = vpack.c.b16 %v755, %v753
    %v1340 = vpack.c.b16 %v758, %v756
    %v1341 = vpack.c.b16 %v759, %v757
    %v1342 = vpack.c.b16 %v762, %v760
    %v1343 = vpack.c.b16 %v763, %v761
    %v1344 = vpack.c.b16 %v766, %v764
    %v1345 = vpack.c.b16 %v767, %v765
    %v1346 = vpack.c.b16 %v770, %v768
    %v1347 = vpack.c.b16 %v771, %v769
    %v1348 = vpack.c.b16 %v774, %v772
    %v1349 = vpack.c.b16 %v775, %v773
    %v1350 = vpack.c.b16 %v778, %v776
    %v1351 = vpack.c.b16 %v779, %v777
    %v1352 = vpack.c.b16 %v782, %v780
    %v1353 = vpack.c.b16 %v783, %v781
    %v1354 = vpack.c.b16 %v786, %v784
    %v1355 = vpack.c.b16 %v787, %v785
    %v1356 = vpack.c.b16 %v790, %v788
    %v1357 = vpack.c.b16 %v791, %v789
    %v1358 = vpack.c.b16 %v794, %v792
    %v1359 = vpack.c.b16 %v795, %v793
    %v1360 = vpack.c.b16 %v798, %v796
    %v1361 = vpack.c.b16 %v799, %v797
    %v1362 = vpack.c.b16 %v802, %v800
    %v1363 = vpack.c.b16 %v803, %v801
    %v1364 = vpack.c.b16 %v806, %v804
    %v1365 = vpack.c.b16 %v807, %v805
    %v1366 = vpack.c.b16 %v810, %v808
    %v1367 = vpack.c.b16 %v811, %v809
    %v1368 = vpack.c.b16 %v814, %v812
    %v1369 = vpack.c.b16 %v815, %v813
    %v1370 = vpack.c.b16 %v818, %v816
    %v1371 = vpack.c.b16 %v819, %v817
    %v1372 = vpack.c.b16 %v822, %v820
    %v1373 = vpack.c.b16 %v823, %v821
    %v1374 = vpack.c.b16 %v826, %v824
    %v1375 = vpack.c.b16 %v827, %v825
    %v1376 = vpack.c.b16 %v830, %v828
    %v1377 = vpack.c.b16 %v831, %v829
    %v1378 = vpack.c.b16 %v834, %v832
    %v1379 = vpack.c.b16 %v835, %v833
    %v1380 = vpack.c.b16 %v838, %v836
    %v1381 = vpack.c.b16 %v839, %v837
    %v1382 = vpack.c.b16 %v842, %v840
    %v1383 = vpack.c.b16 %v843, %v841
    %v1384 = vpack.c.b16 %v846, %v844
    %v1385 = vpack.c.b16 %v847, %v845
    %v1386 = vpack.c.b16 %v850, %v848
    %v1387 = vpack.c.b16 %v851, %v849
    %v1388 = vpack.c.b16 %v854, %v852
    %v1389 = vpack.c.b16 %v855, %v853
    %v1390 = vpack.c.b16 %v858, %v856
    %v1391 = vpack.c.b16 %v859, %v857
    %v1392 = vpack.c.b16 %v862, %v860
    %v1393 = vpack.c.b16 %v863, %v861
    %v1394 = vpack.c.b16 %v866, %v864
    %v1395 = vpack.c.b16 %v867, %v865
    %v1396 = vpack.c.b16 %v870, %v868
    %v1397 = vpack.c.b16 %v871, %v869
    %v1398 = vpack.c.b16 %v874, %v872
    %v1399 = vpack.c.b16 %v875, %v873
    %v1400 = vpack.c.b16 %v878, %v876
    %v1401 = vpack.c.b16 %v879, %v877
    %v1402 = vpack.c.b16 %v882, %v880
    %v1403 = vpack.c.b16 %v883, %v881
    %v1404 = vpack.c.b16 %v886, %v884
    %v1405 = vpack.c.b16 %v887, %v885
    %v1406 = vpack.c.b16 %v890, %v888
    %v1407 = vpack.c.b16 %v891, %v889
    %v1408 = vpack.c.b16 %v894, %v892
    %v1409 = vpack.c.b16 %v895, %v893
    %v1410 = vpack.c.b16 %v898, %v896
    %v1411 = vpack.c.b16 %v899, %v897
    %v1412 = vpack.c.b16 %v902, %v900
    %v1413 = vpack.c.b16 %v903, %v901
    %v1414 = vpack.c.b16 %v906, %v904
    %v1415 = vpack.c.b16 %v907, %v905
    %v1416 = vpack.c.b16 %v910, %v908
    %v1417 = vpack.c.b16 %v911, %v909
    %v1418 = vpack.c.b16 %v914, %v912
    %v1419 = vpack.c.b16 %v915, %v913
    %v1420 = vpack.c.b16 %v918, %v916
    %v1421 = vpack.c.b16 %v919, %v917
    %v1422 = vpack.c.b16 %v922, %v920
    %v1423 = vpack.c.b16 %v923, %v921
    %v1424 = vpack.c.b16 %v926, %v924
    %v1425 = vpack.c.b16 %v927, %v925
    %v1426 = vpack.c.b16 %v930, %v928
    %v1427 = vpack.c.b16 %v931, %v929
    %v1428 = vpack.c.b16 %v934, %v932
    %v1429 = vpack.c.b16 %v935, %v933
    %v1430 = vpack.c.b16 %v938, %v936
    %v1431 = vpack.c.b16 %v939, %v937
    %v1432 = vpack.c.b16 %v942, %v940
    %v1433 = vpack.c.b16 %v943, %v941
    %v1434 = vpack.c.b16 %v946, %v944
    %v1435 = vpack.c.b16 %v947, %v945
    %v1436 = vpack.c.b16 %v950, %v948
    %v1437 = vpack.c.b16 %v951, %v949
    %v1438 = vpack.c.b16 %v954, %v952
    %v1439 = vpack.c.b16 %v955, %v953
    %v1440 = vpack.c.b16 %v958, %v956
    %v1441 = vpack.c.b16 %v959, %v957
    %v1442 = vpack.c.b16 %v962, %v960
    %v1443 = vpack.c.b16 %v963, %v961
    %v1444 = vpack.c.b16 %v966, %v964
    %v1445 = vpack.c.b16 %v967, %v965
    %v1446 = vpack.c.b16 %v970, %v968
    %v1447 = vpack.c.b16 %v971, %v969
    %v1448 = vpack.c.b16 %v974, %v972
    %v1449 = vpack.c.b16 %v975, %v973
    %v1450 = vpack.c.b16 %v978, %v976
    %v1451 = vpack.c.b16 %v979, %v977
    %v1452 = vpack.c.b16 %v982, %v980
    %v1453 = vpack.c.b16 %v983, %v981
    %v1454 = vpack.c.b16 %v986, %v984
    %v1455 = vpack.c.b16 %v987, %v985
    %v1456 = vpack.c.b16 %v990, %v988
    %v1457 = vpack.c.b16 %v991, %v989
    %v1458 = vpack.c.b16 %v994, %v992
    %v1459 = vpack.c.b16 %v995, %v993
    %v1460 = vpack.c.b16 %v998, %v996
    %v1461 = vpack.c.b16 %v999, %v997
    %v1462 = vpack.c.b16 %v1002, %v1000
    %v1463 = vpack.c.b16 %v1003, %v1001
    %v1464 = vpack.c.b16 %v1006, %v1004
    %v1465 = vpack.c.b16 %v1007, %v1005
    %v1466 = vpack.c.b16 %v1010, %v1008
    %v1467 = vpack.c.b16 %v1011, %v1009
    %v1468 = vpack.c.b16 %v1014, %v1012
    %v1469 = vpack.c.b16 %v1015, %v1013
    %v1470 = vpack.c.b16 %v1018, %v1016
    %v1471 = vpack.c.b16 %v1019, %v1017
    %v1472 = vpack.c.b16 %v1022, %v1020
    %v1473 = vpack.c.b16 %v1023, %v1021
    %v1474 = vpack.c.b16 %v1026, %v1024
    %v1475 = vpack.c.b16 %v1027, %v1025
    %v1476 = vpack.c.b16 %v1030, %v1028
    %v1477 = vpack.c.b16 %v1031, %v1029
    %v1478 = vpack.c.b16 %v1034, %v1032
    %v1479 = vpack.c.b16 %v1035, %v1033
    %v1480 = vpack.c.b16 %v1038, %v1036
    %v1481 = vpack.c.b16 %v1039, %v1037
    %v1482 = vpack.c.b16 %v1042, %v1040
    %v1483 = vpack.c.b16 %v1043, %v1041
    %v1484 = vpack.c.b16 %v1046, %v1044
    %v1485 = vpack.c.b16 %v1047, %v1045
    %v1486 = vpack.c.b16 %v1050, %v1048
    %v1487 = vpack.c.b16 %v1051, %v1049
    %v1488 = vpack.c.b16 %v1054, %v1052
    %v1489 = vpack.c.b16 %v1055, %v1053
    %v1490 = vpack.c.b16 %v1058, %v1056
    %v1491 = vpack.c.b16 %v1059, %v1057
    %v1492 = vpack.c.b16 %v1062, %v1060
    %v1493 = vpack.c.b16 %v1063, %v1061
    %v1494 = vpack.c.b16 %v1066, %v1064
    %v1495 = vpack.c.b16 %v1067, %v1065
    %v1496 = vpack.c.b16 %v1070, %v1068
    %v1497 = vpack.c.b16 %v1071, %v1069
    %v1498 = vpack.c.b16 %v1074, %v1072
    %v1499 = vpack.c.b16 %v1075, %v1073
    %v1500 = vpack.c.b16 %v1078, %v1076
    %v1501 = vpack.c.b16 %v1079, %v1077
    %v1502 = vpack.c.b16 %v1082, %v1080
    %v1503 = vpack.c.b16 %v1083, %v1081
    %v1504 = vpack.c.b16 %v1086, %v1084
    %v1505 = vpack.c.b16 %v1087, %v1085
    %v1506 = vpack.c.b16 %v1090, %v1088
    %v1507 = vpack.c.b16 %v1091, %v1089
    %v1508 = vpack.c.b16 %v1094, %v1092
    %v1509 = vpack.c.b16 %v1095, %v1093
    %v1510 = vpack.c.b16 %v1098, %v1096
    %v1511 = vpack.c.b16 %v1099, %v1097
    %v1512 = vpack.c.b16 %v1102, %v1100
    %v1513 = vpack.c.b16 %v1103, %v1101
    %v1514 = vpack.c.b16 %v1106, %v1104
    %v1515 = vpack.c.b16 %v1107, %v1105
    %v1516 = vpack.c.b16 %v1110, %v1108
    %v1517 = vpack.c.b16 %v1111, %v1109
    %v1518 = vpack.c.b16 %v1114, %v1112
    %v1519 = vpack.c.b16 %v1115, %v1113
    %v1520 = vpack.c.b16 %v1118, %v1116
    %v1521 = vpack.c.b16 %v1119, %v1117
    %v1522 = vpack.c.b16 %v1122, %v1120
    %v1523 = vpack.c.b16 %v1123, %v1121
    %v1524 = vpack.c.b16 %v1126, %v1124
    %v1525 = vpack.c.b16 %v1127, %v1125
    %v1526 = vpack.c.b16 %v1130, %v1128
    %v1527 = vpack.c.b16 %v1131, %v1129
    %v1528 = vpack.c.b16 %v1134, %v1132
    %v1529 = vpack.c.b16 %v1135, %v1133
    %v1530 = vpack.c.b16 %v1138, %v1136
    %v1531 = vpack.c.b16 %v1139, %v1137
    %v1532 = vpack.c.b16 %v1142, %v1140
    %v1533 = vpack.c.b16 %v1143, %v1141
    %v1534 = vpack.c.b16 %v1146, %v1144
    %v1535 = vpack.c.b16 %v1147, %v1145
    %v1536 = vpack.c.b16 %v1150, %v1148
    %v1537 = vpack.c.b16 %v1151, %v1149
    %v1538 = vpack.c.b16 %v1154, %v1152
    %v1539 = vpack.c.b16 %v1155, %v1153
    %v1540 = vpack.c.b16 %v1158, %v1156
    %v1541 = vpack.c.b16 %v1159, %v1157
    %v1542 = vpack.c.b16 %v1162, %v1160
    %v1543 = vpack.c.b16 %v1163, %v1161
    %v1544 = vpack.c.b16 %v1166, %v1164
    %v1545 = vpack.c.b16 %v1167, %v1165
    %v1546 = vpack.c.b16 %v1170, %v1168
    %v1547 = vpack.c.b16 %v1171, %v1169
    %v1548 = vpack.c.b16 %v1174, %v1172
    %v1549 = vpack.c.b16 %v1175, %v1173
    %v1550 = vpack.c.b16 %v1178, %v1176
    %v1551 = vpack.c.b16 %v1179, %v1177
    %v1552 = vpack.c.b16 %v1182, %v1180
    %v1553 = vpack.c.b16 %v1183, %v1181
    %v1554 = vpack.c.b16 %v1186, %v1184
    %v1555 = vpack.c.b16 %v1187, %v1185
    %v1556 = vpack.c.b16 %v1190, %v1188
    %v1557 = vpack.c.b16 %v1191, %v1189
    %v1558 = vpack.c.b16 %v1194, %v1192
    %v1559 = vpack.c.b16 %v1195, %v1193
    %v1560 = vpack.c.b16 %v1198, %v1196
    %v1561 = vpack.c.b16 %v1199, %v1197
    %v1562 = vpack.c.b16 %v1202, %v1200
    %v1563 = vpack.c.b16 %v1203, %v1201
    %v1564 = vpack.c.b16 %v1206, %v1204
    %v1565 = vpack.c.b16 %v1207, %v1205
    %v1566 = vpack.c.b16 %v1210, %v1208
    %v1567 = vpack.c.b16 %v1211, %v1209
    %v1568 = vpack.c.b16 %v1214, %v1212
    %v1569 = vpack.c.b16 %v1215, %v1213
    %v1570 = vpack.c.b16 %v1218, %v1216
    %v1571 = vpack.c.b16 %v1219, %v1217
    %v1572 = vpack.c.b16 %v1222, %v1220
    %v1573 = vpack.c.b16 %v1223, %v1221
    %v1574 = vpack.c.b16 %v1226, %v1224
    %v1575 = vpack.c.b16 %v1227, %v1225
    %v1576 = vpack.c.b16 %v1230, %v1228
    %v1577 = vpack.c.b16 %v1231, %v1229
    %v1578 = vpack.c.b16 %v1234, %v1232
    %v1579 = vpack.c.b16 %v1235, %v1233
    %v1580 = vpack.c.b16 %v1238, %v1236
    %v1581 = vpack.c.b16 %v1239, %v1237
    %v1582 = vpack.c.b16 %v1242, %v1240
    %v1583 = vpack.c.b16 %v1243, %v1241
    %v1584 = vpack.c.b16 %v1246, %v1244
    %v1585 = vpack.c.b16 %v1247, %v1245
    %v1586 = vpack.c.b16 %v1250, %v1248
    %v1587 = vpack.c.b16 %v1251, %v1249
    %v1588 = vpack.c.b16 %v1254, %v1252
    %v1589 = vpack.c.b16 %v1255, %v1253
    %v1590 = vpack.c.b16 %v1258, %v1256
    %v1591 = vpack.c.b16 %v1259, %v1257
    %v1592 = vpack.c.b16 %v1262, %v1260
    %v1593 = vpack.c.b16 %v1263, %v1261
    %v1594 = vpack.c.b16 %v1266, %v1264
    %v1595 = vpack.c.b16 %v1267, %v1265
    %v1596 = vpack.c.b16 %v1270, %v1268
    %v1597 = vpack.c.b16 %v1271, %v1269
    %v1598 = vpack.c.b16 %v1274, %v1272
    %v1599 = vpack.c.b16 %v1275, %v1273
    %v1600 = vpack.c.b16 %v1278, %v1276
    %v1601 = vpack.c.b16 %v1279, %v1277
    %v1602 = vpack.c.b16 %v1282, %v1280
    %v1603 = vpack.c.b16 %v1283, %v1281
    %v1604 = vpack.c.b16 %v1286, %v1284
    %v1605 = vpack.c.b16 %v1287, %v1285
    %v1606 = vpack.c.b16 %v1290, %v1288
    %v1607 = vpack.c.b16 %v1291, %v1289
    %v1608 = vpack.c.b16 %v1294, %v1292
    %v1609 = vpack.c.b16 %v1295, %v1293
    %v1610 = vpack.c.b16 %v1298, %v1296
    %v1611 = vpack.c.b16 %v1299, %v1297
    %v1612 = vpack.c.b16 %v1302, %v1300
    %v1613 = vpack.c.b16 %v1303, %v1301
    %v1614 = vpack.c.b16 %v1306, %v1304
    %v1615 = vpack.c.b16 %v1307, %v1305
    %v1616 = vpack.c.b16 %v1310, %v1308
    %v1617 = vpack.c.b16 %v1311, %v1309
    %v1618 = vpack.c.b16 %v1314, %v1312
    %v1619 = vpack.c.b16 %v1315, %v1313
    %v1620 = vpack.c.b16 %v1318, %v1316
    %v1621 = vpack.c.b16 %v1319, %v1317
    %v1622 = vpack.c.b16 %v1322, %v1320
    %v1623 = vpack.c.b16 %v1323, %v1321
    %v1624 = vpack.c.b16 %v1326, %v1324
    %v1625 = vpack.c.b16 %v1327, %v1325
    %v1626 = vpack.c.b16 %v1330, %v1328
    %v1627 = vpack.c.b16 %v1331, %v1329
    %v1628 = vpack.c.b16 %v1334, %v1332
    %v1629 = vpack.c.b16 %v1335, %v1333
    %vm1924 = vcmask 392192
    %v1926 = vsel %vm1924, %v435, 0
    %1928 = vmatprep.subr.bf16.mxu0 %v1351
    %1929 = vmatpush1.bf16.msra.mxu0 %v1350
    %1930 = vmatprep.subr.bf16.mxu0 %v1349
    %1931 = vmatpush1.bf16.msra.mxu0 %v1348
    %1932 = vmatprep.subr.bf16.mxu0 %v1347
    %1933 = vmatpush1.bf16.msra.mxu0 %v1346
    %1934 = vmatprep.subr.bf16.mxu0 %v1345
    %1935 = vmatpush1.bf16.msra.mxu0 %v1344
    %1936 = vmatprep.subr.bf16.mxu0 %v1343
    %1937 = vmatpush1.bf16.msra.mxu0 %v1342
    %1938 = vmatprep.subr.bf16.mxu0 %v1341
    %1939 = vmatpush1.bf16.msra.mxu0 %v1340
    %1940 = vmatprep.subr.bf16.mxu0 %v1339
    %1941 = vmatpush1.bf16.msra.mxu0 %v1338
    %1942 = vmatprep.subr.bf16.mxu0 %v1337
    %1943 = vmatpush1.bf16.msra.mxu0 %v1336
    %1944 = vmatprep.subr.bf16.mxu0 %v1367
    %1945 = vmatpush2.bf16.msra.mxu0 %v1366
    %1946 = vmatprep.subr.bf16.mxu0 %v1365
    %1947 = vmatpush2.bf16.msra.mxu0 %v1364
    %1948 = vmatprep.subr.bf16.mxu0 %v1363
    %1949 = vmatpush2.bf16.msra.mxu0 %v1362
    %1950 = vmatprep.subr.bf16.mxu0 %v1361
    %1951 = vmatpush2.bf16.msra.mxu0 %v1360
    %1952 = vmatprep.subr.bf16.mxu0 %v1359
    %1953 = vmatpush2.bf16.msra.mxu0 %v1358
    %1954 = vmatprep.subr.bf16.mxu0 %v1357
    %1955 = vmatpush2.bf16.msra.mxu0 %v1356
    %1956 = vmatprep.subr.bf16.mxu0 %v1355
    %1957 = vmatpush2.bf16.msra.mxu0 %v1354
    %1958 = vmatprep.subr.bf16.mxu0 %v1353
    %1959 = vmatpush2.bf16.msra.mxu0 %v1352
    %1960 = vmatprep.mubr.bf16.mxu0 %v418
    %1961 = vmatmul.mubr.bf16.gmra.mxu0 %v417
    %v1962 = vpop.f32.mrf.mxu0
    %v1963 = vadd.f32 %v381, %v1962
    %v1964 = vpop.f32.mrf.mxu0
    %v1965 = vadd.f32 %v385, %v1964
    %v1966 = vpop.f32.mrf.mxu0
    %v1967 = vpop.f32.mrf.mxu0
    %1968 = vdwg.mxu0
    %1969 = vmatprep.subr.bf16.mxu0 %v1383
    %1970 = vmatpush1.bf16.msra.mxu0 %v1382
    %1971 = vmatprep.subr.bf16.mxu0 %v1381
    %1972 = vmatpush1.bf16.msra.mxu0 %v1380
    %1973 = vmatprep.subr.bf16.mxu0 %v1379
    %1974 = vmatpush1.bf16.msra.mxu0 %v1378
    %1975 = vmatprep.subr.bf16.mxu0 %v1377
    %1976 = vmatpush1.bf16.msra.mxu0 %v1376
    %1977 = vmatprep.subr.bf16.mxu0 %v1375
    %1978 = vmatpush1.bf16.msra.mxu0 %v1374
    %1979 = vmatprep.subr.bf16.mxu0 %v1373
    %1980 = vmatpush1.bf16.msra.mxu0 %v1372
    %1981 = vmatprep.subr.bf16.mxu0 %v1371
    %1982 = vmatpush1.bf16.msra.mxu0 %v1370
    %1983 = vmatprep.subr.bf16.mxu0 %v1369
    %1984 = vmatpush1.bf16.msra.mxu0 %v1368
    %1985 = vmatprep.subr.bf16.mxu0 %v1399
    %1986 = vmatpush2.bf16.msra.mxu0 %v1398
    %1987 = vmatprep.subr.bf16.mxu0 %v1397
    %1988 = vmatpush2.bf16.msra.mxu0 %v1396
    %1989 = vmatprep.subr.bf16.mxu0 %v1395
    %1990 = vmatpush2.bf16.msra.mxu0 %v1394
    %1991 = vmatprep.subr.bf16.mxu0 %v1393
    %1992 = vmatpush2.bf16.msra.mxu0 %v1392
    %1993 = vmatprep.subr.bf16.mxu0 %v1391
    %1994 = vmatpush2.bf16.msra.mxu0 %v1390
    %1995 = vmatprep.subr.bf16.mxu0 %v1389
    %1996 = vmatpush2.bf16.msra.mxu0 %v1388
    %1997 = vmatprep.subr.bf16.mxu0 %v1387
    %1998 = vmatpush2.bf16.msra.mxu0 %v1386
    %1999 = vmatprep.subr.bf16.mxu0 %v1385
    %2000 = vmatpush2.bf16.msra.mxu0 %v1384
    %2001 = vmatprep.mubr.bf16.mxu0 %v420
    %2002 = vmatmul.mubr.bf16.gmra.mxu0 %v419
    %v2003 = vpop.f32.mrf.mxu0
    %v2004 = vadd.f32 %v1963, %v2003
    %v2005 = vpop.f32.mrf.mxu0
    %v2006 = vadd.f32 %v1965, %v2005
    %v2007 = vpop.f32.mrf.mxu0
    %v2008 = vpop.f32.mrf.mxu0
    %2009 = vdwg.mxu0
    %2010 = vmatprep.subr.bf16.mxu0 %v1415
    %2011 = vmatpush1.bf16.msra.mxu0 %v1414
    %2012 = vmatprep.subr.bf16.mxu0 %v1413
    %2013 = vmatpush1.bf16.msra.mxu0 %v1412
    %2014 = vmatprep.subr.bf16.mxu0 %v1411
    %2015 = vmatpush1.bf16.msra.mxu0 %v1410
    %2016 = vmatprep.subr.bf16.mxu0 %v1409
    %2017 = vmatpush1.bf16.msra.mxu0 %v1408
    %2018 = vmatprep.subr.bf16.mxu0 %v1407
    %2019 = vmatpush1.bf16.msra.mxu0 %v1406
    %2020 = vmatprep.subr.bf16.mxu0 %v1405
    %2021 = vmatpush1.bf16.msra.mxu0 %v1404
    %2022 = vmatprep.subr.bf16.mxu0 %v1403
    %2023 = vmatpush1.bf16.msra.mxu0 %v1402
    %2024 = vmatprep.subr.bf16.mxu0 %v1401
    %2025 = vmatpush1.bf16.msra.mxu0 %v1400
    %2026 = vmatprep.subr.bf16.mxu0 %v1431
    %2027 = vmatpush2.bf16.msra.mxu0 %v1430
    %2028 = vmatprep.subr.bf16.mxu0 %v1429
    %2029 = vmatpush2.bf16.msra.mxu0 %v1428
    %2030 = vmatprep.subr.bf16.mxu0 %v1427
    %2031 = vmatpush2.bf16.msra.mxu0 %v1426
    %2032 = vmatprep.subr.bf16.mxu0 %v1425
    %2033 = vmatpush2.bf16.msra.mxu0 %v1424
    %2034 = vmatprep.subr.bf16.mxu0 %v1423
    %2035 = vmatpush2.bf16.msra.mxu0 %v1422
    %2036 = vmatprep.subr.bf16.mxu0 %v1421
    %2037 = vmatpush2.bf16.msra.mxu0 %v1420
    %2038 = vmatprep.subr.bf16.mxu0 %v1419
    %2039 = vmatpush2.bf16.msra.mxu0 %v1418
    %2040 = vmatprep.subr.bf16.mxu0 %v1417
    %2041 = vmatpush2.bf16.msra.mxu0 %v1416
    %2042 = vmatprep.mubr.bf16.mxu0 %v422
    %2043 = vmatmul.mubr.bf16.gmra.mxu0 %v421
    %v2044 = vpop.f32.mrf.mxu0
    %v2045 = vadd.f32 %v2004, %v2044
    %v2046 = vpop.f32.mrf.mxu0
    %v2047 = vadd.f32 %v2006, %v2046
    %v2048 = vpop.f32.mrf.mxu0
    %v2049 = vpop.f32.mrf.mxu0
    %2050 = vdwg.mxu0
    %2051 = vmatprep.subr.bf16.mxu0 %v1447
    %2052 = vmatpush1.bf16.msra.mxu0 %v1446
    %2053 = vmatprep.subr.bf16.mxu0 %v1445
    %2054 = vmatpush1.bf16.msra.mxu0 %v1444
    %2055 = vmatprep.subr.bf16.mxu0 %v1443
    %2056 = vmatpush1.bf16.msra.mxu0 %v1442
    %2057 = vmatprep.subr.bf16.mxu0 %v1441
    %2058 = vmatpush1.bf16.msra.mxu0 %v1440
    %2059 = vmatprep.subr.bf16.mxu0 %v1439
    %2060 = vmatpush1.bf16.msra.mxu0 %v1438
    %2061 = vmatprep.subr.bf16.mxu0 %v1437
    %2062 = vmatpush1.bf16.msra.mxu0 %v1436
    %2063 = vmatprep.subr.bf16.mxu0 %v1435
    %2064 = vmatpush1.bf16.msra.mxu0 %v1434
    %2065 = vmatprep.subr.bf16.mxu0 %v1433
    %2066 = vmatpush1.bf16.msra.mxu0 %v1432
    %2067 = vmatprep.subr.bf16.mxu0 %v1463
    %2068 = vmatpush2.bf16.msra.mxu0 %v1462
    %2069 = vmatprep.subr.bf16.mxu0 %v1461
    %2070 = vmatpush2.bf16.msra.mxu0 %v1460
    %2071 = vmatprep.subr.bf16.mxu0 %v1459
    %2072 = vmatpush2.bf16.msra.mxu0 %v1458
    %2073 = vmatprep.subr.bf16.mxu0 %v1457
    %2074 = vmatpush2.bf16.msra.mxu0 %v1456
    %2075 = vmatprep.subr.bf16.mxu0 %v1455
    %2076 = vmatpush2.bf16.msra.mxu0 %v1454
    %2077 = vmatprep.subr.bf16.mxu0 %v1453
    %2078 = vmatpush2.bf16.msra.mxu0 %v1452
    %2079 = vmatprep.subr.bf16.mxu0 %v1451
    %2080 = vmatpush2.bf16.msra.mxu0 %v1450
    %2081 = vmatprep.subr.bf16.mxu0 %v1449
    %2082 = vmatpush2.bf16.msra.mxu0 %v1448
    %2083 = vmatprep.mubr.bf16.mxu0 %v424
    %2084 = vmatmul.mubr.bf16.gmra.mxu0 %v423
    %v2085 = vpop.f32.mrf.mxu0
    %v2086 = vadd.f32 %v2045, %v2085
    %v2087 = vpop.f32.mrf.mxu0
    %v2088 = vadd.f32 %v2047, %v2087
    %v2089 = vpop.f32.mrf.mxu0
    %v2090 = vpop.f32.mrf.mxu0
    %2091 = vdwg.mxu0
    %2092 = vmatprep.subr.bf16.mxu0 %v1479
    %2093 = vmatpush1.bf16.msra.mxu0 %v1478
    %2094 = vmatprep.subr.bf16.mxu0 %v1477
    %2095 = vmatpush1.bf16.msra.mxu0 %v1476
    %2096 = vmatprep.subr.bf16.mxu0 %v1475
    %2097 = vmatpush1.bf16.msra.mxu0 %v1474
    %2098 = vmatprep.subr.bf16.mxu0 %v1473
    %2099 = vmatpush1.bf16.msra.mxu0 %v1472
    %2100 = vmatprep.subr.bf16.mxu0 %v1471
    %2101 = vmatpush1.bf16.msra.mxu0 %v1470
    %2102 = vmatprep.subr.bf16.mxu0 %v1469
    %2103 = vmatpush1.bf16.msra.mxu0 %v1468
    %2104 = vmatprep.subr.bf16.mxu0 %v1467
    %2105 = vmatpush1.bf16.msra.mxu0 %v1466
    %2106 = vmatprep.subr.bf16.mxu0 %v1465
    %2107 = vmatpush1.bf16.msra.mxu0 %v1464
    %2108 = vmatprep.subr.bf16.mxu0 %v1495
    %2109 = vmatpush2.bf16.msra.mxu0 %v1494
    %2110 = vmatprep.subr.bf16.mxu0 %v1493
    %2111 = vmatpush2.bf16.msra.mxu0 %v1492
    %2112 = vmatprep.subr.bf16.mxu0 %v1491
    %2113 = vmatpush2.bf16.msra.mxu0 %v1490
    %2114 = vmatprep.subr.bf16.mxu0 %v1489
    %2115 = vmatpush2.bf16.msra.mxu0 %v1488
    %2116 = vmatprep.subr.bf16.mxu0 %v1487
    %2117 = vmatpush2.bf16.msra.mxu0 %v1486
    %2118 = vmatprep.subr.bf16.mxu0 %v1485
    %2119 = vmatpush2.bf16.msra.mxu0 %v1484
    %2120 = vmatprep.subr.bf16.mxu0 %v1483
    %2121 = vmatpush2.bf16.msra.mxu0 %v1482
    %2122 = vmatprep.subr.bf16.mxu0 %v1481
    %2123 = vmatpush2.bf16.msra.mxu0 %v1480
    %2124 = vmatprep.mubr.bf16.mxu0 %v426
    %2125 = vmatmul.mubr.bf16.gmra.mxu0 %v425
    %v2126 = vpop.f32.mrf.mxu0
    %v2127 = vadd.f32 %v2086, %v2126
    %v2128 = vpop.f32.mrf.mxu0
    %v2129 = vadd.f32 %v2088, %v2128
    %v2130 = vpop.f32.mrf.mxu0
    %v2131 = vpop.f32.mrf.mxu0
    %2132 = vdwg.mxu0
    %2133 = vmatprep.subr.bf16.mxu0 %v1511
    %2134 = vmatpush1.bf16.msra.mxu0 %v1510
    %2135 = vmatprep.subr.bf16.mxu0 %v1509
    %2136 = vmatpush1.bf16.msra.mxu0 %v1508
    %2137 = vmatprep.subr.bf16.mxu0 %v1507
    %2138 = vmatpush1.bf16.msra.mxu0 %v1506
    %2139 = vmatprep.subr.bf16.mxu0 %v1505
    %2140 = vmatpush1.bf16.msra.mxu0 %v1504
    %2141 = vmatprep.subr.bf16.mxu0 %v1503
    %2142 = vmatpush1.bf16.msra.mxu0 %v1502
    %2143 = vmatprep.subr.bf16.mxu0 %v1501
    %2144 = vmatpush1.bf16.msra.mxu0 %v1500
    %2145 = vmatprep.subr.bf16.mxu0 %v1499
    %2146 = vmatpush1.bf16.msra.mxu0 %v1498
    %2147 = vmatprep.subr.bf16.mxu0 %v1497
    %2148 = vmatpush1.bf16.msra.mxu0 %v1496
    %2149 = vmatprep.subr.bf16.mxu0 %v1527
    %2150 = vmatpush2.bf16.msra.mxu0 %v1526
    %2151 = vmatprep.subr.bf16.mxu0 %v1525
    %2152 = vmatpush2.bf16.msra.mxu0 %v1524
    %2153 = vmatprep.subr.bf16.mxu0 %v1523
    %2154 = vmatpush2.bf16.msra.mxu0 %v1522
    %2155 = vmatprep.subr.bf16.mxu0 %v1521
    %2156 = vmatpush2.bf16.msra.mxu0 %v1520
    %2157 = vmatprep.subr.bf16.mxu0 %v1519
    %2158 = vmatpush2.bf16.msra.mxu0 %v1518
    %2159 = vmatprep.subr.bf16.mxu0 %v1517
    %2160 = vmatpush2.bf16.msra.mxu0 %v1516
    %2161 = vmatprep.subr.bf16.mxu0 %v1515
    %2162 = vmatpush2.bf16.msra.mxu0 %v1514
    %2163 = vmatprep.subr.bf16.mxu0 %v1513
    %2164 = vmatpush2.bf16.msra.mxu0 %v1512
    %2165 = vmatprep.mubr.bf16.mxu0 %v428
    %2166 = vmatmul.mubr.bf16.gmra.mxu0 %v427
    %v2167 = vpop.f32.mrf.mxu0
    %v2168 = vadd.f32 %v2127, %v2167
    %v2169 = vpop.f32.mrf.mxu0
    %v2170 = vadd.f32 %v2129, %v2169
    %v2171 = vpop.f32.mrf.mxu0
    %v2172 = vpop.f32.mrf.mxu0
    %2173 = vdwg.mxu0
    %2174 = vmatprep.subr.bf16.mxu0 %v1543
    %2175 = vmatpush1.bf16.msra.mxu0 %v1542
    %2176 = vmatprep.subr.bf16.mxu0 %v1541
    %2177 = vmatpush1.bf16.msra.mxu0 %v1540
    %2178 = vmatprep.subr.bf16.mxu0 %v1539
    %2179 = vmatpush1.bf16.msra.mxu0 %v1538
    %2180 = vmatprep.subr.bf16.mxu0 %v1537
    %2181 = vmatpush1.bf16.msra.mxu0 %v1536
    %2182 = vmatprep.subr.bf16.mxu0 %v1535
    %2183 = vmatpush1.bf16.msra.mxu0 %v1534
    %2184 = vmatprep.subr.bf16.mxu0 %v1533
    %2185 = vmatpush1.bf16.msra.mxu0 %v1532
    %2186 = vmatprep.subr.bf16.mxu0 %v1531
    %2187 = vmatpush1.bf16.msra.mxu0 %v1530
    %2188 = vmatprep.subr.bf16.mxu0 %v1529
    %2189 = vmatpush1.bf16.msra.mxu0 %v1528
    %2190 = vmatprep.subr.bf16.mxu0 %v1559
    %2191 = vmatpush2.bf16.msra.mxu0 %v1558
    %2192 = vmatprep.subr.bf16.mxu0 %v1557
    %2193 = vmatpush2.bf16.msra.mxu0 %v1556
    %2194 = vmatprep.subr.bf16.mxu0 %v1555
    %2195 = vmatpush2.bf16.msra.mxu0 %v1554
    %2196 = vmatprep.subr.bf16.mxu0 %v1553
    %2197 = vmatpush2.bf16.msra.mxu0 %v1552
    %2198 = vmatprep.subr.bf16.mxu0 %v1551
    %2199 = vmatpush2.bf16.msra.mxu0 %v1550
    %2200 = vmatprep.subr.bf16.mxu0 %v1549
    %2201 = vmatpush2.bf16.msra.mxu0 %v1548
    %2202 = vmatprep.subr.bf16.mxu0 %v1547
    %2203 = vmatpush2.bf16.msra.mxu0 %v1546
    %2204 = vmatprep.subr.bf16.mxu0 %v1545
    %2205 = vmatpush2.bf16.msra.mxu0 %v1544
    %2206 = vmatprep.mubr.bf16.mxu0 %v430
    %2207 = vmatmul.mubr.bf16.gmra.mxu0 %v429
    %v2208 = vpop.f32.mrf.mxu0
    %v2209 = vadd.f32 %v2168, %v2208
    %v2210 = vpop.f32.mrf.mxu0
    %v2211 = vadd.f32 %v2170, %v2210
    %v2212 = vpop.f32.mrf.mxu0
    %v2213 = vpop.f32.mrf.mxu0
    %2214 = vdwg.mxu0
    %2215 = vmatprep.subr.bf16.mxu0 %v1575
    %2216 = vmatpush1.bf16.msra.mxu0 %v1574
    %2217 = vmatprep.subr.bf16.mxu0 %v1573
    %2218 = vmatpush1.bf16.msra.mxu0 %v1572
    %2219 = vmatprep.subr.bf16.mxu0 %v1571
    %2220 = vmatpush1.bf16.msra.mxu0 %v1570
    %2221 = vmatprep.subr.bf16.mxu0 %v1569
    %2222 = vmatpush1.bf16.msra.mxu0 %v1568
    %2223 = vmatprep.subr.bf16.mxu0 %v1567
    %2224 = vmatpush1.bf16.msra.mxu0 %v1566
    %2225 = vmatprep.subr.bf16.mxu0 %v1565
    %2226 = vmatpush1.bf16.msra.mxu0 %v1564
    %2227 = vmatprep.subr.bf16.mxu0 %v1563
    %2228 = vmatpush1.bf16.msra.mxu0 %v1562
    %2229 = vmatprep.subr.bf16.mxu0 %v1561
    %2230 = vmatpush1.bf16.msra.mxu0 %v1560
    %2231 = vmatprep.subr.bf16.mxu0 %v1591
    %2232 = vmatpush2.bf16.msra.mxu0 %v1590
    %2233 = vmatprep.subr.bf16.mxu0 %v1589
    %2234 = vmatpush2.bf16.msra.mxu0 %v1588
    %2235 = vmatprep.subr.bf16.mxu0 %v1587
    %2236 = vmatpush2.bf16.msra.mxu0 %v1586
    %2237 = vmatprep.subr.bf16.mxu0 %v1585
    %2238 = vmatpush2.bf16.msra.mxu0 %v1584
    %2239 = vmatprep.subr.bf16.mxu0 %v1583
    %2240 = vmatpush2.bf16.msra.mxu0 %v1582
    %2241 = vmatprep.subr.bf16.mxu0 %v1581
    %2242 = vmatpush2.bf16.msra.mxu0 %v1580
    %2243 = vmatprep.subr.bf16.mxu0 %v1579
    %2244 = vmatpush2.bf16.msra.mxu0 %v1578
    %2245 = vmatprep.subr.bf16.mxu0 %v1577
    %2246 = vmatpush2.bf16.msra.mxu0 %v1576
    %2247 = vmatprep.mubr.bf16.mxu0 %v432
    %2248 = vmatmul.mubr.bf16.gmra.mxu0 %v431
    %v2249 = vpop.f32.mrf.mxu0
    %v2250 = vadd.f32 %v2209, %v2249
    %v2251 = vpop.f32.mrf.mxu0
    %v2252 = vadd.f32 %v2211, %v2251
    %v2253 = vpop.f32.mrf.mxu0
    %v2254 = vpop.f32.mrf.mxu0
    %2255 = vdwg.mxu0
    %2256 = vmatprep.subr.bf16.mxu0 %v1607
    %2257 = vmatpush1.bf16.msra.mxu0 %v1606
    %2258 = vmatprep.subr.bf16.mxu0 %v1605
    %2259 = vmatpush1.bf16.msra.mxu0 %v1604
    %2260 = vmatprep.subr.bf16.mxu0 %v1603
    %2261 = vmatpush1.bf16.msra.mxu0 %v1602
    %2262 = vmatprep.subr.bf16.mxu0 %v1601
    %2263 = vmatpush1.bf16.msra.mxu0 %v1600
    %2264 = vmatprep.subr.bf16.mxu0 %v1599
    %2265 = vmatpush1.bf16.msra.mxu0 %v1598
    %2266 = vmatprep.subr.bf16.mxu0 %v1597
    %2267 = vmatpush1.bf16.msra.mxu0 %v1596
    %2268 = vmatprep.subr.bf16.mxu0 %v1595
    %2269 = vmatpush1.bf16.msra.mxu0 %v1594
    %2270 = vmatprep.subr.bf16.mxu0 %v1593
    %2271 = vmatpush1.bf16.msra.mxu0 %v1592
    %2272 = vmatprep.subr.bf16.mxu0 %v1623
    %2273 = vmatpush2.bf16.msra.mxu0 %v1622
    %2274 = vmatprep.subr.bf16.mxu0 %v1621
    %2275 = vmatpush2.bf16.msra.mxu0 %v1620
    %2276 = vmatprep.subr.bf16.mxu0 %v1619
    %2277 = vmatpush2.bf16.msra.mxu0 %v1618
    %2278 = vmatprep.subr.bf16.mxu0 %v1617
    %2279 = vmatpush2.bf16.msra.mxu0 %v1616
    %2280 = vmatprep.subr.bf16.mxu0 %v1615
    %2281 = vmatpush2.bf16.msra.mxu0 %v1614
    %2282 = vmatprep.subr.bf16.mxu0 %v1613
    %2283 = vmatpush2.bf16.msra.mxu0 %v1612
    %2284 = vmatprep.subr.bf16.mxu0 %v1611
    %2285 = vmatpush2.bf16.msra.mxu0 %v1610
    %2286 = vmatprep.subr.bf16.mxu0 %v1609
    %2287 = vmatpush2.bf16.msra.mxu0 %v1608
    %2288 = vmatprep.mubr.bf16.mxu0 %v434
    %2289 = vmatmul.mubr.bf16.gmra.mxu0 %v433
    %v2290 = vpop.f32.mrf.mxu0
    %v2291 = vadd.f32 %v2250, %v2290
    %v2292 = vpop.f32.mrf.mxu0
    %v2293 = vadd.f32 %v2252, %v2292
    %v2294 = vpop.f32.mrf.mxu0
    %v2295 = vpop.f32.mrf.mxu0
    %2296 = vdwg.mxu0
    %2297 = vmatprep.subr.bf16.mxu0 0
    %2298 = vmatpush1.bf16.msra.mxu0 0
    %2299 = vmatprep.subr.bf16.mxu0 0
    %2300 = vmatpush1.bf16.msra.mxu0 0
    %2301 = vmatprep.subr.bf16.mxu0 0
    %2302 = vmatpush1.bf16.msra.mxu0 0
    %2303 = vmatprep.subr.bf16.mxu0 0
    %2304 = vmatpush1.bf16.msra.mxu0 0
    %2305 = vmatprep.subr.bf16.mxu0 0
    %2306 = vmatpush1.bf16.msra.mxu0 0
    %2307 = vmatprep.subr.bf16.mxu0 %v1629
    %2308 = vmatpush1.bf16.msra.mxu0 %v1628
    %2309 = vmatprep.subr.bf16.mxu0 %v1627
    %2310 = vmatpush1.bf16.msra.mxu0 %v1626
    %2311 = vmatprep.subr.bf16.mxu0 %v1625
    %2312 = vmatpush1.bf16.msra.mxu0 %v1624
    %2313 = vmatprep.subr.bf16.mxu0 0
    %2314 = vmatpush2.bf16.msra.mxu0 0
    %2315 = vmatprep.subr.bf16.mxu0 0
    %2316 = vmatpush2.bf16.msra.mxu0 0
    %2317 = vmatprep.subr.bf16.mxu0 0
    %2318 = vmatpush2.bf16.msra.mxu0 0
    %2319 = vmatprep.subr.bf16.mxu0 0
    %2320 = vmatpush2.bf16.msra.mxu0 0
    %2321 = vmatprep.subr.bf16.mxu0 0
    %2322 = vmatpush2.bf16.msra.mxu0 0
    %2323 = vmatprep.subr.bf16.mxu0 0
    %2324 = vmatpush2.bf16.msra.mxu0 0
    %2325 = vmatprep.subr.bf16.mxu0 0
    %2326 = vmatpush2.bf16.msra.mxu0 0
    %2327 = vmatprep.subr.bf16.mxu0 0
    %2328 = vmatpush2.bf16.msra.mxu0 0
    %2329 = vmatprep.mubr.bf16.mxu0 0
    %2330 = vmatmul.mubr.bf16.gmra.mxu0 %v1926
    %v2331 = vpop.f32.mrf.mxu0
    %v2332 = vadd.f32 %v2291, %v2331
    %v2333 = vpop.f32.mrf.mxu0
    %v2334 = vadd.f32 %v2293, %v2333
    %v2335 = vpop.f32.mrf.mxu0
    %v2336 = vpop.f32.mrf.mxu0
    %2337 = vdwg.mxu0
    %v2338 = vmax.f32 %v2332, 0.0
    %v2339 = vmax.f32 %v2334, 0.0
    %v2340 = vpack.c.bf16 %v2338, %v2338
    %v2341 = vpack.c.bf16 %v2339, %v2339
    %v2342 = vld [vmem:[#allocation6] sm:$0xf]
    %v2343 = vld [vmem:[#allocation6 + $0x4] sm:$0xf]
    %v2344 = vld [vmem:[#allocation6 + $0x8] sm:$0xf]
    %v2345 = vld [vmem:[#allocation6 + $0xc] sm:$0xf]
    %v2346 = vld [vmem:[#allocation6 + $0x10] sm:$0xf]
    %v2347 = vld [vmem:[#allocation6 + $0x14] sm:$0xf]
    %v2348 = vld [vmem:[#allocation6 + $0x18] sm:$0xf]
    %v2349 = vld [vmem:[#allocation6 + $0x1c] sm:$0xf]
    %v2350 = vld [vmem:[#allocation6 + $0x20] sm:$0xf]
    %v2351 = vld [vmem:[#allocation6 + $0x24] sm:$0xf]
    %v2352 = vld [vmem:[#allocation6 + $0x28] sm:$0xf]
    %v2353 = vld [vmem:[#allocation6 + $0x2c] sm:$0xf]
    %v2354 = vld [vmem:[#allocation6 + $0x30] sm:$0xf]
    %v2355 = vld [vmem:[#allocation6 + $0x34] sm:$0xf]
    %v2356 = vld [vmem:[#allocation6 + $0x38] sm:$0xf]
    %v2357 = vld [vmem:[#allocation6 + $0x3c] sm:$0xf]
    %v2358 = vld [vmem:[#allocation6 + $0x40] sm:$0xf]
    %v2359 = vld [vmem:[#allocation6 + $0x44] sm:$0xf]
    %v2360 = vld [vmem:[#allocation6 + $0x48] sm:$0xf]
    %v2361 = vld [vmem:[#allocation6 + $0x4c] sm:$0xf]
    %v2362 = vld [vmem:[#allocation6 + $0x50] sm:$0xf]
    %v2363 = vld [vmem:[#allocation6 + $0x54] sm:$0xf]
    %v2364 = vld [vmem:[#allocation6 + $0x58] sm:$0xf]
    %v2365 = vld [vmem:[#allocation6 + $0x5c] sm:$0xf]
    %v2366 = vld [vmem:[#allocation6 + $0x60] sm:$0xf]
    %v2367 = vld [vmem:[#allocation6 + $0x64] sm:$0xf]
    %v2368 = vld [vmem:[#allocation6 + $0x68] sm:$0xf]
    %v2369 = vld [vmem:[#allocation6 + $0x6c] sm:$0xf]
    %v2370 = vld [vmem:[#allocation6 + $0x70] sm:$0xf]
    %v2371 = vld [vmem:[#allocation6 + $0x74] sm:$0xf]
    %v2372 = vld [vmem:[#allocation6 + $0x78] sm:$0xf]
    %v2373 = vld [vmem:[#allocation6 + $0x7c] sm:$0xf]
    %v2374 = vld [vmem:[#allocation7] sm:$0x1]
    %v2376 = vlaneseq
    %v2377 = vshrl.u32 %v2376, 7
    %v2378 = vsub.s32 0, %v2377
    %v2379 = vrot.slane %v2374, %v2378
    %v2413 = vunpack.c.l.b16 %v2342
    %v2414 = vunpack.c.l.b16 %v2343
    %v2415 = vunpack.c.l.b16 %v2344
    %v2416 = vunpack.c.l.b16 %v2345
    %v2417 = vunpack.c.l.b16 %v2346
    %v2418 = vunpack.c.l.b16 %v2347
    %v2419 = vunpack.c.l.b16 %v2348
    %v2420 = vunpack.c.l.b16 %v2349
    %v2421 = vunpack.c.l.b16 %v2350
    %v2422 = vunpack.c.l.b16 %v2351
    %v2423 = vunpack.c.l.b16 %v2352
    %v2424 = vunpack.c.l.b16 %v2353
    %v2425 = vunpack.c.l.b16 %v2354
    %v2426 = vunpack.c.l.b16 %v2355
    %v2427 = vunpack.c.l.b16 %v2356
    %v2428 = vunpack.c.l.b16 %v2357
    %v2429 = vunpack.c.l.b16 %v2358
    %v2430 = vunpack.c.l.b16 %v2359
    %v2431 = vunpack.c.l.b16 %v2360
    %v2432 = vunpack.c.l.b16 %v2361
    %v2433 = vunpack.c.l.b16 %v2362
    %v2434 = vunpack.c.l.b16 %v2363
    %v2435 = vunpack.c.l.b16 %v2364
    %v2436 = vunpack.c.l.b16 %v2365
    %v2437 = vunpack.c.l.b16 %v2366
    %v2438 = vunpack.c.l.b16 %v2367
    %v2439 = vunpack.c.l.b16 %v2368
    %v2440 = vunpack.c.l.b16 %v2369
    %v2441 = vunpack.c.l.b16 %v2370
    %v2442 = vunpack.c.l.b16 %v2371
    %v2443 = vunpack.c.l.b16 %v2372
    %v2444 = vunpack.c.l.b16 %v2373
    %v2445 = vpack.c.b16 %v2414, %v2413
    %v2446 = vpack.c.b16 %v2416, %v2415
    %v2447 = vpack.c.b16 %v2418, %v2417
    %v2448 = vpack.c.b16 %v2420, %v2419
    %v2449 = vpack.c.b16 %v2422, %v2421
    %v2450 = vpack.c.b16 %v2424, %v2423
    %v2451 = vpack.c.b16 %v2426, %v2425
    %v2452 = vpack.c.b16 %v2428, %v2427
    %v2453 = vpack.c.b16 %v2430, %v2429
    %v2454 = vpack.c.b16 %v2432, %v2431
    %v2455 = vpack.c.b16 %v2434, %v2433
    %v2456 = vpack.c.b16 %v2436, %v2435
    %v2457 = vpack.c.b16 %v2438, %v2437
    %v2458 = vpack.c.b16 %v2440, %v2439
    %v2459 = vpack.c.b16 %v2442, %v2441
    %v2460 = vpack.c.b16 %v2444, %v2443
    %2477 = vmatprep.subr.bf16.mxu0 0
    %2478 = vmatpush1.bf16.msra.mxu0 %v2452
    %2479 = vmatprep.subr.bf16.mxu0 0
    %2480 = vmatpush1.bf16.msra.mxu0 %v2451
    %2481 = vmatprep.subr.bf16.mxu0 0
    %2482 = vmatpush1.bf16.msra.mxu0 %v2450
    %2483 = vmatprep.subr.bf16.mxu0 0
    %2484 = vmatpush1.bf16.msra.mxu0 %v2449
    %2485 = vmatprep.subr.bf16.mxu0 0
    %2486 = vmatpush1.bf16.msra.mxu0 %v2448
    %2487 = vmatprep.subr.bf16.mxu0 0
    %2488 = vmatpush1.bf16.msra.mxu0 %v2447
    %2489 = vmatprep.subr.bf16.mxu0 0
    %2490 = vmatpush1.bf16.msra.mxu0 %v2446
    %2491 = vmatprep.subr.bf16.mxu0 0
    %2492 = vmatpush1.bf16.msra.mxu0 %v2445
    %2493 = vmatprep.subr.bf16.mxu0 0
    %2494 = vmatpush2.bf16.msra.mxu0 %v2460
    %2495 = vmatprep.subr.bf16.mxu0 0
    %2496 = vmatpush2.bf16.msra.mxu0 %v2459
    %2497 = vmatprep.subr.bf16.mxu0 0
    %2498 = vmatpush2.bf16.msra.mxu0 %v2458
    %2499 = vmatprep.subr.bf16.mxu0 0
    %2500 = vmatpush2.bf16.msra.mxu0 %v2457
    %2501 = vmatprep.subr.bf16.mxu0 0
    %2502 = vmatpush2.bf16.msra.mxu0 %v2456
    %2503 = vmatprep.subr.bf16.mxu0 0
    %2504 = vmatpush2.bf16.msra.mxu0 %v2455
    %2505 = vmatprep.subr.bf16.mxu0 0
    %2506 = vmatpush2.bf16.msra.mxu0 %v2454
    %2507 = vmatprep.subr.bf16.mxu0 0
    %2508 = vmatpush2.bf16.msra.mxu0 %v2453
    %2509 = vmatprep.mubr.bf16.mxu0 %v2341
    %2510 = vmatmul.mubr.bf16.gmra.mxu0 %v2340
    %v2511 = vpop.f32.mrf.mxu0
    %v2512 = vadd.f32 %v2379, %v2511
    %v2513 = vpop.f32.mrf.mxu0
    %v2514 = vpop.f32.mrf.mxu0
    %v2515 = vpop.f32.mrf.mxu0
    %2516 = vdwg.mxu0
    %2517 = vmax.xlane.f32.xlu0 %v2512
    %v2518 = vpop.xlane.xlu0 %2517
    %v2519 = vsub.f32 %v2512, %v2518
    %v2520 = vmul.f32 %v2519, 1.442695
    %v2521 = vpow.pop %v2520
    %2522 = vadd.xlane.f32.xlu0 %v2521
    %v2523 = vpop.xlane.xlu0 %2522
    %v2524 = vrcp.pop %v2523
    %v2525 = vmul.f32 %v2521, %v2524
    %2526 = vst [vmem:[%s5] sm:$0xff] %v2525
    // Predicated region
    $region38: #{convnet_forward.1} parent=1 // pred_check
      _
    $region39: #{convnet_forward.1} parent=1 // pred_check_branch
      %2528 = sbr.rel (0) target = $region41
    $region40: #{convnet_forward.1} parent=1 // pred_region
      _
    $region41: #{convnet_forward.1} parent=1 // pred_fallthru
      _
    // Predicated region
    $region42: #{convnet_forward.1} parent=1 // pred_check
      _
    $region43: #{convnet_forward.1} parent=1 // pred_check_branch
      %2530 = sbr.rel (0) target = $region45
    $region44: #{convnet_forward.1} parent=1 // pred_region
      _
    $region45: #{convnet_forward.1} parent=1 // pred_fallthru
      _
    %2531 = vsyncpa [#allocation3], 1
    %2532 = vsyncpa [#allocation5], 1
    %2533 = vsyncpa [#allocation8], 1

</llo_original>
